<compile_context>
chip_gen: v6e
topology: v6e:2x2x1
jax: 0.10.0
libtpu: 0.0.40
codegen_flags: <defaults>
</compile_context>

<pallas_src>
import functools

import jax
import jax.numpy as jnp
from jax import lax
from jax.experimental import pallas as pl
from jax.experimental.pallas import tpu as pltpu


def _round_up(x, m):
    return (x + m - 1) // m * m


# --------------------------------- kernel ----------------------------------- #
def _pcg_fused_kernel(lat_ref, w1_ref, w2_ref, uv_out, b_out,
                      *, num_mix, head_stride, fk, nf):
    """One fused forward: 6 heads (uu3, vv3, bb3, uu4, vv4, bb4) -> 2 conv layers."""
    lat = lat_ref[...]                                                   # [1, K1]

    # All six hidden layers in one matmul (bias folded in via constant-1 lane).
    h = jnp.maximum(
        jnp.dot(lat, w1_ref[...], preferred_element_type=jnp.float32), 0.0)  # [1, 128]

    # All six second layers (mixture logits + mixture values, bias folded in)
    # in one matmul.
    out = jnp.dot(h, w2_ref[...], preferred_element_type=jnp.float32)   # [1, 6*128]

    M = num_mix

    def head(k, val_dim):
        base = k * head_stride
        # softmax over the M mixture-coefficient logits
        logits = out[:, base:base + M]                                   # [1, M]
        mx = jnp.max(logits, axis=-1, keepdims=True)
        e = jnp.exp(logits - mx)
        coeff = e / jnp.sum(e, axis=-1, keepdims=True)                   # [1, M]
        # mixture-weighted sum of the value slices: M VPU FMAs on lane slices
        vbase = base + M
        acc = coeff[:, 0:1] * out[:, vbase:vbase + val_dim]
        for m in range(1, M):
            acc = acc + coeff[:, m:m + 1] * \
                out[:, vbase + m * val_dim: vbase + (m + 1) * val_dim]
        return acc                                                       # [1, V]

    uu3 = head(0, fk)
    vv3 = head(1, fk)
    bb3 = head(2, nf)
    uu4 = head(3, fk)
    vv4 = head(4, fk)
    bb4 = head(5, nf)

    # outer products uu^T @ vv -> [FK, FK]
    outer = lambda u, v: lax.dot_general(
        u, v, (((0,), (0,)), ((), ())), preferred_element_type=jnp.float32)
    uv_out[0] = jnp.maximum(outer(uu3, vv3), 0.0)
    uv_out[1] = jnp.maximum(outer(uu4, vv4), 0.0)
    b_out[0] = jnp.maximum(bb3, 0.0)
    b_out[1] = jnp.maximum(bb4, 0.0)


# ------------------------- parameter construction --------------------------- #
def init_linear(key, out_dim, in_dim):
    """Deterministic kaiming-uniform-ish init (torch layout: W [out,in], b [out])."""
    kw, kb = jax.random.split(key)
    bound_w = (3.0 / in_dim) ** 0.5
    bound_b = (1.0 / in_dim) ** 0.5
    w = jax.random.uniform(kw, (out_dim, in_dim), jnp.float32, -bound_w, bound_w)
    b = jax.random.uniform(kb, (out_dim,), jnp.float32, -bound_b, bound_b)
    return w, b


def make_head(key, in_dim, hid_dim, num_mix, val_dim):
    """nn.Sequential(Linear(in,hid), ReLU, Linear(hid, M + M*val)) in torch layout."""
    k1, k2 = jax.random.split(key)
    w1, b1 = init_linear(k1, hid_dim, in_dim)
    w2, b2 = init_linear(k2, num_mix + num_mix * val_dim, hid_dim)
    return dict(w1=w1, b1=b1, w2=w2, b2=b2)


def pack_pcg_params(heads, num_plastic, num_mix):
    """Pack six torch-layout heads into the two kernel slabs.  Done ONCE.

    heads: list of (params, hidden_dim, val_dim) in order
           [uu3, vv3, bb3, uu4, vv4, bb4].
    """
    P, M = num_plastic, num_mix
    hidden_dims = [h for (_, h, _) in heads]
    out_dims = [M + M * v for (_, _, v) in heads]
    hid_total = sum(hidden_dims)

    K1 = _round_up(P + 1, 128)               # padded lat lanes (incl. constant-1)
    H_pad = _round_up(hid_total + 1, 128)    # padded hidden lanes (incl. constant-1)
    head_stride = _round_up(max(out_dims), 128)
    out_total = head_stride * len(heads)
    const_lane = hid_total                   # hidden lane carrying the constant 1.0

    w1_aug = jnp.zeros((K1, H_pad), jnp.float32)
    w2_full = jnp.zeros((H_pad, out_total), jnp.float32)

    hoff = 0
    for k, (p, H, V) in enumerate(heads):
        O = M + M * V
        # first layer: torch W1 [H,P] -> [P,H] block; bias folded into row P
        w1_aug = w1_aug.at[:P, hoff:hoff + H].set(p["w1"].T)
        w1_aug = w1_aug.at[P, hoff:hoff + H].set(p["b1"])
        # second layer: torch W2 [O,H] -> [H,O] block at this head's lane band;
        # bias folded into the constant-1 hidden row
        base = k * head_stride
        w2_full = w2_full.at[hoff:hoff + H, base:base + O].set(p["w2"].T)
        w2_full = w2_full.at[const_lane, base:base + O].set(p["b2"])
        hoff += H
    # constant-1 generator column: h[const_lane] = relu(0*lat + 1) = 1
    w1_aug = w1_aug.at[P, const_lane].set(1.0)

    layout = dict(K1=K1, P=P, M=M, head_stride=head_stride)
    return w1_aug, w2_full, layout


# --------------------------------- wrapper ----------------------------------- #
def pcg_forward(context_params, w1_aug, w2_full, layout, *, fk, nf):
    K1, P, M = layout["K1"], layout["P"], layout["M"]

    lat_aug = jnp.zeros((1, K1), jnp.float32)
    lat_aug = lat_aug.at[0, :P].set(context_params.astype(jnp.float32))
    lat_aug = lat_aug.at[0, P].set(1.0)

    kernel = functools.partial(
        _pcg_fused_kernel, num_mix=M, head_stride=layout["head_stride"],
        fk=fk, nf=nf)

    vmem = pl.BlockSpec(memory_space=pltpu.MemorySpace.VMEM)
    flops = 2 * (K1 * w1_aug.shape[1] + w1_aug.shape[1] * w2_full.shape[1]) \
        + 4 * fk * fk + 2 * 12 * M * fk
    bytes_accessed = 4 * (lat_aug.size + w1_aug.size + w2_full.size
                          + 2 * fk * fk + 2 * nf)

    uv_slab, b_slab = pl.pallas_call(
        kernel,
        out_shape=(jax.ShapeDtypeStruct((2, fk, fk), jnp.float32),
                   jax.ShapeDtypeStruct((2, 1, nf), jnp.float32)),
        in_specs=[vmem, vmem, vmem],
        out_specs=(vmem, vmem),
        cost_estimate=pl.CostEstimate(
            flops=int(flops), transcendentals=6 * M,
            bytes_accessed=int(bytes_accessed)),
    )(lat_aug, w1_aug, w2_full)

    conv3_uv, conv4_uv = uv_slab[0], uv_slab[1]
    conv3_b, conv4_b = b_slab[0, 0], b_slab[1, 0]
    return [conv3_uv, conv3_b, conv4_uv, conv4_b]


# --------------------------- pure-JAX reference ------------------------------ #
def ref_head(lat, p, num_mix, val_dim):
    h = jnp.maximum(lat @ p["w1"].T + p["b1"], 0.0)
    out = h @ p["w2"].T + p["b2"]
    coeff = jax.nn.softmax(out[:num_mix])
    vals = out[num_mix:].reshape(num_mix, val_dim)
    return (vals * coeff[:, None]).sum(0)


def ref_layer(lat, uu_p, vv_p, bb_p, num_mix, fk, nf):
    uu = ref_head(lat, uu_p, num_mix, fk)
    vv = ref_head(lat, vv_p, num_mix, fk)
    bb = ref_head(lat, bb_p, num_mix, nf)
    conv_uv = jnp.maximum(uu[:, None] * vv[None, :], 0.0)
    conv_b = jnp.maximum(bb, 0.0)
    return conv_uv, conv_b


# ----------------------------------- main ------------------------------------ #
if __name__ == "__main__":
    # Small shapes consistent with the module's forward.
    NUM_FILTERS = 8
    KERNEL_SIZE = 3
    NUM_PLASTIC = 32
    NUM_MIX = 5
    FK = NUM_FILTERS * KERNEL_SIZE   # 24

    key = jax.random.PRNGKey(0)
    keys = jax.random.split(key, 7)

    # torch-layout parameters for uu_3, vv_3, bb_3, uu_4, vv_4, bb_4
    uu3 = make_head(keys[0], NUM_PLASTIC, FK, NUM_MIX, FK)
    vv3 = make_head(keys[1], NUM_PLASTIC, FK, NUM_MIX, FK)
    bb3 = make_head(keys[2], NUM_PLASTIC, NUM_FILTERS, NUM_MIX, NUM_FILTERS)
    uu4 = make_head(keys[3], NUM_PLASTIC, FK, NUM_MIX, FK)
    vv4 = make_head(keys[4], NUM_PLASTIC, FK, NUM_MIX, FK)
    bb4 = make_head(keys[5], NUM_PLASTIC, NUM_FILTERS, NUM_MIX, NUM_FILTERS)

    # Pack the parameters into the two kernel slabs ONCE (static parameters).
    heads = [(uu3, FK, FK), (vv3, FK, FK), (bb3, NUM_FILTERS, NUM_FILTERS),
             (uu4, FK, FK), (vv4, FK, FK), (bb4, NUM_FILTERS, NUM_FILTERS)]
    w1_aug, w2_full, layout = pack_pcg_params(heads, NUM_PLASTIC, NUM_MIX)
    w1_aug, w2_full = jax.block_until_ready((w1_aug, w2_full))

    # context_params input (module initializes it to zeros; random to exercise math)
    context_params = jax.random.normal(keys[6], (NUM_PLASTIC,), jnp.float32)

    forward = jax.jit(
        lambda lat: pcg_forward(lat, w1_aug, w2_full, layout,
                                fk=FK, nf=NUM_FILTERS))

    conv3_uv, conv3_b, conv4_uv, conv4_b = forward(context_params)
    outputs = [conv3_uv, conv3_b, conv4_uv, conv4_b]
    jax.block_until_ready(outputs)

    # correctness check against pure-JAX reference of the PyTorch semantics
    r3_uv, r3_b = ref_layer(context_params, uu3, vv3, bb3, NUM_MIX, FK, NUM_FILTERS)
    r4_uv, r4_b = ref_layer(context_params, uu4, vv4, bb4, NUM_MIX, FK, NUM_FILTERS)
    for got, want in [(conv3_uv, r3_uv), (conv3_b, r3_b),
                      (conv4_uv, r4_uv), (conv4_b, r4_b)]:
        assert got.shape == want.shape, (got.shape, want.shape)
        assert jnp.allclose(got, want, atol=1e-4, rtol=1e-4), \
            float(jnp.max(jnp.abs(got - want)))

    print("KERNEL_OK")
</pallas_src>

<mosaic_0001>
module attributes {stable_mosaic.version = 11 : i64} {
  func.func @_pcg_fused_kernel(%arg0: memref<1x128xf32, #tpu.memory_space<vmem>>, %arg1: memref<128x128xf32, #tpu.memory_space<vmem>>, %arg2: memref<128x768xf32, #tpu.memory_space<vmem>>, %arg3: memref<2x24x24xf32, #tpu.memory_space<vmem>>, %arg4: memref<2x1x8xf32, #tpu.memory_space<vmem>>) attributes {dimension_semantics = [], scalar_prefetch = 0 : i64, scratch_operands = 0 : i64, tpu.core_type = #tpu.core_type<tc>} {
    %c0 = arith.constant 0 : index
    %c0_0 = arith.constant 0 : index
    %0 = vector.load %arg0[%c0, %c0_0] : memref<1x128xf32, #tpu.memory_space<vmem>>, vector<1x128xf32>
    %c0_1 = arith.constant 0 : index
    %c0_2 = arith.constant 0 : index
    %1 = vector.load %arg1[%c0_1, %c0_2] : memref<128x128xf32, #tpu.memory_space<vmem>>, vector<128x128xf32>
    %cst = arith.constant dense<0.000000e+00> : vector<1x128xf32>
    %2 = tpu.matmul %0, %1, %cst {dimension_numbers = #tpu.dot_dimension_numbers<[1], [0], [0], [1], [0, 0, 1, 1], [], []>} : vector<1x128xf32>, vector<128x128xf32>, vector<1x128xf32> -> vector<1x128xf32>
    %cst_3 = arith.constant 0.000000e+00 : f32
    %3 = vector.broadcast %cst_3 : f32 to vector<1x128xf32>
    %4 = arith.maximumf %2, %3 : vector<1x128xf32>
    %c0_4 = arith.constant 0 : index
    %c0_5 = arith.constant 0 : index
    %5 = vector.load %arg2[%c0_4, %c0_5] : memref<128x768xf32, #tpu.memory_space<vmem>>, vector<128x768xf32>
    %cst_6 = arith.constant dense<0.000000e+00> : vector<1x768xf32>
    %6 = tpu.matmul %4, %5, %cst_6 {dimension_numbers = #tpu.dot_dimension_numbers<[1], [0], [0], [1], [0, 0, 1, 1], [], []>} : vector<1x128xf32>, vector<128x768xf32>, vector<1x768xf32> -> vector<1x768xf32>
    %7 = vector.extract_strided_slice %6 {offsets = [0, 0], sizes = [1, 5], strides = [1, 1]} : vector<1x768xf32> to vector<1x5xf32>
    %cst_7 = arith.constant dense<0xFF800000> : vector<1xf32>
    %8 = vector.multi_reduction <maximumf>, %7, %cst_7 [1] : vector<1x5xf32> to vector<1xf32>
    %9 = vector.shape_cast %8 : vector<1xf32> to vector<1x1xf32>
    %10 = vector.broadcast %9 : vector<1x1xf32> to vector<1x5xf32>
    %11 = arith.subf %7, %10 : vector<1x5xf32>
    %12 = math.exp %11 : vector<1x5xf32>
    %cst_8 = arith.constant dense<0.000000e+00> : vector<1xf32>
    %13 = vector.multi_reduction <add>, %12, %cst_8 [1] : vector<1x5xf32> to vector<1xf32>
    %14 = vector.shape_cast %13 : vector<1xf32> to vector<1x1xf32>
    %15 = vector.broadcast %14 : vector<1x1xf32> to vector<1x5xf32>
    %16 = arith.divf %12, %15 : vector<1x5xf32>
    %17 = vector.extract_strided_slice %16 {offsets = [0, 0], sizes = [1, 1], strides = [1, 1]} : vector<1x5xf32> to vector<1x1xf32>
    %18 = vector.extract_strided_slice %6 {offsets = [0, 5], sizes = [1, 24], strides = [1, 1]} : vector<1x768xf32> to vector<1x24xf32>
    %19 = vector.broadcast %17 : vector<1x1xf32> to vector<1x24xf32>
    %20 = arith.mulf %19, %18 : vector<1x24xf32>
    %21 = vector.extract_strided_slice %16 {offsets = [0, 1], sizes = [1, 1], strides = [1, 1]} : vector<1x5xf32> to vector<1x1xf32>
    %22 = vector.extract_strided_slice %6 {offsets = [0, 29], sizes = [1, 24], strides = [1, 1]} : vector<1x768xf32> to vector<1x24xf32>
    %23 = vector.broadcast %21 : vector<1x1xf32> to vector<1x24xf32>
    %24 = arith.mulf %23, %22 : vector<1x24xf32>
    %25 = arith.addf %20, %24 : vector<1x24xf32>
    %26 = vector.extract_strided_slice %16 {offsets = [0, 2], sizes = [1, 1], strides = [1, 1]} : vector<1x5xf32> to vector<1x1xf32>
    %27 = vector.extract_strided_slice %6 {offsets = [0, 53], sizes = [1, 24], strides = [1, 1]} : vector<1x768xf32> to vector<1x24xf32>
    %28 = vector.broadcast %26 : vector<1x1xf32> to vector<1x24xf32>
    %29 = arith.mulf %28, %27 : vector<1x24xf32>
    %30 = arith.addf %25, %29 : vector<1x24xf32>
    %31 = vector.extract_strided_slice %16 {offsets = [0, 3], sizes = [1, 1], strides = [1, 1]} : vector<1x5xf32> to vector<1x1xf32>
    %32 = vector.extract_strided_slice %6 {offsets = [0, 77], sizes = [1, 24], strides = [1, 1]} : vector<1x768xf32> to vector<1x24xf32>
    %33 = vector.broadcast %31 : vector<1x1xf32> to vector<1x24xf32>
    %34 = arith.mulf %33, %32 : vector<1x24xf32>
    %35 = arith.addf %30, %34 : vector<1x24xf32>
    %36 = vector.extract_strided_slice %16 {offsets = [0, 4], sizes = [1, 1], strides = [1, 1]} : vector<1x5xf32> to vector<1x1xf32>
    %37 = vector.extract_strided_slice %6 {offsets = [0, 101], sizes = [1, 24], strides = [1, 1]} : vector<1x768xf32> to vector<1x24xf32>
    %38 = vector.broadcast %36 : vector<1x1xf32> to vector<1x24xf32>
    %39 = arith.mulf %38, %37 : vector<1x24xf32>
    %40 = arith.addf %35, %39 : vector<1x24xf32>
    %41 = vector.extract_strided_slice %6 {offsets = [0, 128], sizes = [1, 5], strides = [1, 1]} : vector<1x768xf32> to vector<1x5xf32>
    %cst_9 = arith.constant dense<0xFF800000> : vector<1xf32>
    %42 = vector.multi_reduction <maximumf>, %41, %cst_9 [1] : vector<1x5xf32> to vector<1xf32>
    %43 = vector.shape_cast %42 : vector<1xf32> to vector<1x1xf32>
    %44 = vector.broadcast %43 : vector<1x1xf32> to vector<1x5xf32>
    %45 = arith.subf %41, %44 : vector<1x5xf32>
    %46 = math.exp %45 : vector<1x5xf32>
    %cst_10 = arith.constant dense<0.000000e+00> : vector<1xf32>
    %47 = vector.multi_reduction <add>, %46, %cst_10 [1] : vector<1x5xf32> to vector<1xf32>
    %48 = vector.shape_cast %47 : vector<1xf32> to vector<1x1xf32>
    %49 = vector.broadcast %48 : vector<1x1xf32> to vector<1x5xf32>
    %50 = arith.divf %46, %49 : vector<1x5xf32>
    %51 = vector.extract_strided_slice %50 {offsets = [0, 0], sizes = [1, 1], strides = [1, 1]} : vector<1x5xf32> to vector<1x1xf32>
    %52 = vector.extract_strided_slice %6 {offsets = [0, 133], sizes = [1, 24], strides = [1, 1]} : vector<1x768xf32> to vector<1x24xf32>
    %53 = vector.broadcast %51 : vector<1x1xf32> to vector<1x24xf32>
    %54 = arith.mulf %53, %52 : vector<1x24xf32>
    %55 = vector.extract_strided_slice %50 {offsets = [0, 1], sizes = [1, 1], strides = [1, 1]} : vector<1x5xf32> to vector<1x1xf32>
    %56 = vector.extract_strided_slice %6 {offsets = [0, 157], sizes = [1, 24], strides = [1, 1]} : vector<1x768xf32> to vector<1x24xf32>
    %57 = vector.broadcast %55 : vector<1x1xf32> to vector<1x24xf32>
    %58 = arith.mulf %57, %56 : vector<1x24xf32>
    %59 = arith.addf %54, %58 : vector<1x24xf32>
    %60 = vector.extract_strided_slice %50 {offsets = [0, 2], sizes = [1, 1], strides = [1, 1]} : vector<1x5xf32> to vector<1x1xf32>
    %61 = vector.extract_strided_slice %6 {offsets = [0, 181], sizes = [1, 24], strides = [1, 1]} : vector<1x768xf32> to vector<1x24xf32>
    %62 = vector.broadcast %60 : vector<1x1xf32> to vector<1x24xf32>
    %63 = arith.mulf %62, %61 : vector<1x24xf32>
    %64 = arith.addf %59, %63 : vector<1x24xf32>
    %65 = vector.extract_strided_slice %50 {offsets = [0, 3], sizes = [1, 1], strides = [1, 1]} : vector<1x5xf32> to vector<1x1xf32>
    %66 = vector.extract_strided_slice %6 {offsets = [0, 205], sizes = [1, 24], strides = [1, 1]} : vector<1x768xf32> to vector<1x24xf32>
    %67 = vector.broadcast %65 : vector<1x1xf32> to vector<1x24xf32>
    %68 = arith.mulf %67, %66 : vector<1x24xf32>
    %69 = arith.addf %64, %68 : vector<1x24xf32>
    %70 = vector.extract_strided_slice %50 {offsets = [0, 4], sizes = [1, 1], strides = [1, 1]} : vector<1x5xf32> to vector<1x1xf32>
    %71 = vector.extract_strided_slice %6 {offsets = [0, 229], sizes = [1, 24], strides = [1, 1]} : vector<1x768xf32> to vector<1x24xf32>
    %72 = vector.broadcast %70 : vector<1x1xf32> to vector<1x24xf32>
    %73 = arith.mulf %72, %71 : vector<1x24xf32>
    %74 = arith.addf %69, %73 : vector<1x24xf32>
    %75 = vector.extract_strided_slice %6 {offsets = [0, 256], sizes = [1, 5], strides = [1, 1]} : vector<1x768xf32> to vector<1x5xf32>
    %cst_11 = arith.constant dense<0xFF800000> : vector<1xf32>
    %76 = vector.multi_reduction <maximumf>, %75, %cst_11 [1] : vector<1x5xf32> to vector<1xf32>
    %77 = vector.shape_cast %76 : vector<1xf32> to vector<1x1xf32>
    %78 = vector.broadcast %77 : vector<1x1xf32> to vector<1x5xf32>
    %79 = arith.subf %75, %78 : vector<1x5xf32>
    %80 = math.exp %79 : vector<1x5xf32>
    %cst_12 = arith.constant dense<0.000000e+00> : vector<1xf32>
    %81 = vector.multi_reduction <add>, %80, %cst_12 [1] : vector<1x5xf32> to vector<1xf32>
    %82 = vector.shape_cast %81 : vector<1xf32> to vector<1x1xf32>
    %83 = vector.broadcast %82 : vector<1x1xf32> to vector<1x5xf32>
    %84 = arith.divf %80, %83 : vector<1x5xf32>
    %85 = vector.extract_strided_slice %84 {offsets = [0, 0], sizes = [1, 1], strides = [1, 1]} : vector<1x5xf32> to vector<1x1xf32>
    %86 = vector.extract_strided_slice %6 {offsets = [0, 261], sizes = [1, 8], strides = [1, 1]} : vector<1x768xf32> to vector<1x8xf32>
    %87 = vector.broadcast %85 : vector<1x1xf32> to vector<1x8xf32>
    %88 = arith.mulf %87, %86 : vector<1x8xf32>
    %89 = vector.extract_strided_slice %84 {offsets = [0, 1], sizes = [1, 1], strides = [1, 1]} : vector<1x5xf32> to vector<1x1xf32>
    %90 = vector.extract_strided_slice %6 {offsets = [0, 269], sizes = [1, 8], strides = [1, 1]} : vector<1x768xf32> to vector<1x8xf32>
    %91 = vector.broadcast %89 : vector<1x1xf32> to vector<1x8xf32>
    %92 = arith.mulf %91, %90 : vector<1x8xf32>
    %93 = arith.addf %88, %92 : vector<1x8xf32>
    %94 = vector.extract_strided_slice %84 {offsets = [0, 2], sizes = [1, 1], strides = [1, 1]} : vector<1x5xf32> to vector<1x1xf32>
    %95 = vector.extract_strided_slice %6 {offsets = [0, 277], sizes = [1, 8], strides = [1, 1]} : vector<1x768xf32> to vector<1x8xf32>
    %96 = vector.broadcast %94 : vector<1x1xf32> to vector<1x8xf32>
    %97 = arith.mulf %96, %95 : vector<1x8xf32>
    %98 = arith.addf %93, %97 : vector<1x8xf32>
    %99 = vector.extract_strided_slice %84 {offsets = [0, 3], sizes = [1, 1], strides = [1, 1]} : vector<1x5xf32> to vector<1x1xf32>
    %100 = vector.extract_strided_slice %6 {offsets = [0, 285], sizes = [1, 8], strides = [1, 1]} : vector<1x768xf32> to vector<1x8xf32>
    %101 = vector.broadcast %99 : vector<1x1xf32> to vector<1x8xf32>
    %102 = arith.mulf %101, %100 : vector<1x8xf32>
    %103 = arith.addf %98, %102 : vector<1x8xf32>
    %104 = vector.extract_strided_slice %84 {offsets = [0, 4], sizes = [1, 1], strides = [1, 1]} : vector<1x5xf32> to vector<1x1xf32>
    %105 = vector.extract_strided_slice %6 {offsets = [0, 293], sizes = [1, 8], strides = [1, 1]} : vector<1x768xf32> to vector<1x8xf32>
    %106 = vector.broadcast %104 : vector<1x1xf32> to vector<1x8xf32>
    %107 = arith.mulf %106, %105 : vector<1x8xf32>
    %108 = arith.addf %103, %107 : vector<1x8xf32>
    %109 = vector.extract_strided_slice %6 {offsets = [0, 384], sizes = [1, 5], strides = [1, 1]} : vector<1x768xf32> to vector<1x5xf32>
    %cst_13 = arith.constant dense<0xFF800000> : vector<1xf32>
    %110 = vector.multi_reduction <maximumf>, %109, %cst_13 [1] : vector<1x5xf32> to vector<1xf32>
    %111 = vector.shape_cast %110 : vector<1xf32> to vector<1x1xf32>
    %112 = vector.broadcast %111 : vector<1x1xf32> to vector<1x5xf32>
    %113 = arith.subf %109, %112 : vector<1x5xf32>
    %114 = math.exp %113 : vector<1x5xf32>
    %cst_14 = arith.constant dense<0.000000e+00> : vector<1xf32>
    %115 = vector.multi_reduction <add>, %114, %cst_14 [1] : vector<1x5xf32> to vector<1xf32>
    %116 = vector.shape_cast %115 : vector<1xf32> to vector<1x1xf32>
    %117 = vector.broadcast %116 : vector<1x1xf32> to vector<1x5xf32>
    %118 = arith.divf %114, %117 : vector<1x5xf32>
    %119 = vector.extract_strided_slice %118 {offsets = [0, 0], sizes = [1, 1], strides = [1, 1]} : vector<1x5xf32> to vector<1x1xf32>
    %120 = vector.extract_strided_slice %6 {offsets = [0, 389], sizes = [1, 24], strides = [1, 1]} : vector<1x768xf32> to vector<1x24xf32>
    %121 = vector.broadcast %119 : vector<1x1xf32> to vector<1x24xf32>
    %122 = arith.mulf %121, %120 : vector<1x24xf32>
    %123 = vector.extract_strided_slice %118 {offsets = [0, 1], sizes = [1, 1], strides = [1, 1]} : vector<1x5xf32> to vector<1x1xf32>
    %124 = vector.extract_strided_slice %6 {offsets = [0, 413], sizes = [1, 24], strides = [1, 1]} : vector<1x768xf32> to vector<1x24xf32>
    %125 = vector.broadcast %123 : vector<1x1xf32> to vector<1x24xf32>
    %126 = arith.mulf %125, %124 : vector<1x24xf32>
    %127 = arith.addf %122, %126 : vector<1x24xf32>
    %128 = vector.extract_strided_slice %118 {offsets = [0, 2], sizes = [1, 1], strides = [1, 1]} : vector<1x5xf32> to vector<1x1xf32>
    %129 = vector.extract_strided_slice %6 {offsets = [0, 437], sizes = [1, 24], strides = [1, 1]} : vector<1x768xf32> to vector<1x24xf32>
    %130 = vector.broadcast %128 : vector<1x1xf32> to vector<1x24xf32>
    %131 = arith.mulf %130, %129 : vector<1x24xf32>
    %132 = arith.addf %127, %131 : vector<1x24xf32>
    %133 = vector.extract_strided_slice %118 {offsets = [0, 3], sizes = [1, 1], strides = [1, 1]} : vector<1x5xf32> to vector<1x1xf32>
    %134 = vector.extract_strided_slice %6 {offsets = [0, 461], sizes = [1, 24], strides = [1, 1]} : vector<1x768xf32> to vector<1x24xf32>
    %135 = vector.broadcast %133 : vector<1x1xf32> to vector<1x24xf32>
    %136 = arith.mulf %135, %134 : vector<1x24xf32>
    %137 = arith.addf %132, %136 : vector<1x24xf32>
    %138 = vector.extract_strided_slice %118 {offsets = [0, 4], sizes = [1, 1], strides = [1, 1]} : vector<1x5xf32> to vector<1x1xf32>
    %139 = vector.extract_strided_slice %6 {offsets = [0, 485], sizes = [1, 24], strides = [1, 1]} : vector<1x768xf32> to vector<1x24xf32>
    %140 = vector.broadcast %138 : vector<1x1xf32> to vector<1x24xf32>
    %141 = arith.mulf %140, %139 : vector<1x24xf32>
    %142 = arith.addf %137, %141 : vector<1x24xf32>
    %143 = vector.extract_strided_slice %6 {offsets = [0, 512], sizes = [1, 5], strides = [1, 1]} : vector<1x768xf32> to vector<1x5xf32>
    %cst_15 = arith.constant dense<0xFF800000> : vector<1xf32>
    %144 = vector.multi_reduction <maximumf>, %143, %cst_15 [1] : vector<1x5xf32> to vector<1xf32>
    %145 = vector.shape_cast %144 : vector<1xf32> to vector<1x1xf32>
    %146 = vector.broadcast %145 : vector<1x1xf32> to vector<1x5xf32>
    %147 = arith.subf %143, %146 : vector<1x5xf32>
    %148 = math.exp %147 : vector<1x5xf32>
    %cst_16 = arith.constant dense<0.000000e+00> : vector<1xf32>
    %149 = vector.multi_reduction <add>, %148, %cst_16 [1] : vector<1x5xf32> to vector<1xf32>
    %150 = vector.shape_cast %149 : vector<1xf32> to vector<1x1xf32>
    %151 = vector.broadcast %150 : vector<1x1xf32> to vector<1x5xf32>
    %152 = arith.divf %148, %151 : vector<1x5xf32>
    %153 = vector.extract_strided_slice %152 {offsets = [0, 0], sizes = [1, 1], strides = [1, 1]} : vector<1x5xf32> to vector<1x1xf32>
    %154 = vector.extract_strided_slice %6 {offsets = [0, 517], sizes = [1, 24], strides = [1, 1]} : vector<1x768xf32> to vector<1x24xf32>
    %155 = vector.broadcast %153 : vector<1x1xf32> to vector<1x24xf32>
    %156 = arith.mulf %155, %154 : vector<1x24xf32>
    %157 = vector.extract_strided_slice %152 {offsets = [0, 1], sizes = [1, 1], strides = [1, 1]} : vector<1x5xf32> to vector<1x1xf32>
    %158 = vector.extract_strided_slice %6 {offsets = [0, 541], sizes = [1, 24], strides = [1, 1]} : vector<1x768xf32> to vector<1x24xf32>
    %159 = vector.broadcast %157 : vector<1x1xf32> to vector<1x24xf32>
    %160 = arith.mulf %159, %158 : vector<1x24xf32>
    %161 = arith.addf %156, %160 : vector<1x24xf32>
    %162 = vector.extract_strided_slice %152 {offsets = [0, 2], sizes = [1, 1], strides = [1, 1]} : vector<1x5xf32> to vector<1x1xf32>
    %163 = vector.extract_strided_slice %6 {offsets = [0, 565], sizes = [1, 24], strides = [1, 1]} : vector<1x768xf32> to vector<1x24xf32>
    %164 = vector.broadcast %162 : vector<1x1xf32> to vector<1x24xf32>
    %165 = arith.mulf %164, %163 : vector<1x24xf32>
    %166 = arith.addf %161, %165 : vector<1x24xf32>
    %167 = vector.extract_strided_slice %152 {offsets = [0, 3], sizes = [1, 1], strides = [1, 1]} : vector<1x5xf32> to vector<1x1xf32>
    %168 = vector.extract_strided_slice %6 {offsets = [0, 589], sizes = [1, 24], strides = [1, 1]} : vector<1x768xf32> to vector<1x24xf32>
    %169 = vector.broadcast %167 : vector<1x1xf32> to vector<1x24xf32>
    %170 = arith.mulf %169, %168 : vector<1x24xf32>
    %171 = arith.addf %166, %170 : vector<1x24xf32>
    %172 = vector.extract_strided_slice %152 {offsets = [0, 4], sizes = [1, 1], strides = [1, 1]} : vector<1x5xf32> to vector<1x1xf32>
    %173 = vector.extract_strided_slice %6 {offsets = [0, 613], sizes = [1, 24], strides = [1, 1]} : vector<1x768xf32> to vector<1x24xf32>
    %174 = vector.broadcast %172 : vector<1x1xf32> to vector<1x24xf32>
    %175 = arith.mulf %174, %173 : vector<1x24xf32>
    %176 = arith.addf %171, %175 : vector<1x24xf32>
    %177 = vector.extract_strided_slice %6 {offsets = [0, 640], sizes = [1, 5], strides = [1, 1]} : vector<1x768xf32> to vector<1x5xf32>
    %cst_17 = arith.constant dense<0xFF800000> : vector<1xf32>
    %178 = vector.multi_reduction <maximumf>, %177, %cst_17 [1] : vector<1x5xf32> to vector<1xf32>
    %179 = vector.shape_cast %178 : vector<1xf32> to vector<1x1xf32>
    %180 = vector.broadcast %179 : vector<1x1xf32> to vector<1x5xf32>
    %181 = arith.subf %177, %180 : vector<1x5xf32>
    %182 = math.exp %181 : vector<1x5xf32>
    %cst_18 = arith.constant dense<0.000000e+00> : vector<1xf32>
    %183 = vector.multi_reduction <add>, %182, %cst_18 [1] : vector<1x5xf32> to vector<1xf32>
    %184 = vector.shape_cast %183 : vector<1xf32> to vector<1x1xf32>
    %185 = vector.broadcast %184 : vector<1x1xf32> to vector<1x5xf32>
    %186 = arith.divf %182, %185 : vector<1x5xf32>
    %187 = vector.extract_strided_slice %186 {offsets = [0, 0], sizes = [1, 1], strides = [1, 1]} : vector<1x5xf32> to vector<1x1xf32>
    %188 = vector.extract_strided_slice %6 {offsets = [0, 645], sizes = [1, 8], strides = [1, 1]} : vector<1x768xf32> to vector<1x8xf32>
    %189 = vector.broadcast %187 : vector<1x1xf32> to vector<1x8xf32>
    %190 = arith.mulf %189, %188 : vector<1x8xf32>
    %191 = vector.extract_strided_slice %186 {offsets = [0, 1], sizes = [1, 1], strides = [1, 1]} : vector<1x5xf32> to vector<1x1xf32>
    %192 = vector.extract_strided_slice %6 {offsets = [0, 653], sizes = [1, 8], strides = [1, 1]} : vector<1x768xf32> to vector<1x8xf32>
    %193 = vector.broadcast %191 : vector<1x1xf32> to vector<1x8xf32>
    %194 = arith.mulf %193, %192 : vector<1x8xf32>
    %195 = arith.addf %190, %194 : vector<1x8xf32>
    %196 = vector.extract_strided_slice %186 {offsets = [0, 2], sizes = [1, 1], strides = [1, 1]} : vector<1x5xf32> to vector<1x1xf32>
    %197 = vector.extract_strided_slice %6 {offsets = [0, 661], sizes = [1, 8], strides = [1, 1]} : vector<1x768xf32> to vector<1x8xf32>
    %198 = vector.broadcast %196 : vector<1x1xf32> to vector<1x8xf32>
    %199 = arith.mulf %198, %197 : vector<1x8xf32>
    %200 = arith.addf %195, %199 : vector<1x8xf32>
    %201 = vector.extract_strided_slice %186 {offsets = [0, 3], sizes = [1, 1], strides = [1, 1]} : vector<1x5xf32> to vector<1x1xf32>
    %202 = vector.extract_strided_slice %6 {offsets = [0, 669], sizes = [1, 8], strides = [1, 1]} : vector<1x768xf32> to vector<1x8xf32>
    %203 = vector.broadcast %201 : vector<1x1xf32> to vector<1x8xf32>
    %204 = arith.mulf %203, %202 : vector<1x8xf32>
    %205 = arith.addf %200, %204 : vector<1x8xf32>
    %206 = vector.extract_strided_slice %186 {offsets = [0, 4], sizes = [1, 1], strides = [1, 1]} : vector<1x5xf32> to vector<1x1xf32>
    %207 = vector.extract_strided_slice %6 {offsets = [0, 677], sizes = [1, 8], strides = [1, 1]} : vector<1x768xf32> to vector<1x8xf32>
    %208 = vector.broadcast %206 : vector<1x1xf32> to vector<1x8xf32>
    %209 = arith.mulf %208, %207 : vector<1x8xf32>
    %210 = arith.addf %205, %209 : vector<1x8xf32>
    %cst_19 = arith.constant dense<0.000000e+00> : vector<24x24xf32>
    %211 = tpu.matmul %40, %74, %cst_19 {dimension_numbers = #tpu.dot_dimension_numbers<[0], [0], [1], [1], [0, 1, 1, 1], [], []>} : vector<1x24xf32>, vector<1x24xf32>, vector<24x24xf32> -> vector<24x24xf32>
    %cst_20 = arith.constant 0.000000e+00 : f32
    %212 = vector.broadcast %cst_20 : f32 to vector<24x24xf32>
    %213 = arith.maximumf %211, %212 : vector<24x24xf32>
    %c0_21 = arith.constant 0 : index
    %c0_22 = arith.constant 0 : index
    %c0_23 = arith.constant 0 : index
    %214 = vector.load %arg3[%c0_21, %c0_22, %c0_23] : memref<2x24x24xf32, #tpu.memory_space<vmem>>, vector<1x24x24xf32>
    %215 = vector.shape_cast %214 : vector<1x24x24xf32> to vector<24x24xf32>
    %216 = vector.shape_cast %213 : vector<24x24xf32> to vector<1x24x24xf32>
    tpu.vector_store %arg3[%c0_21, %c0_22, %c0_23], %216 {strides = array<i32>} : memref<2x24x24xf32, #tpu.memory_space<vmem>>, vector<1x24x24xf32>,
    %cst_24 = arith.constant dense<0.000000e+00> : vector<24x24xf32>
    %217 = tpu.matmul %142, %176, %cst_24 {dimension_numbers = #tpu.dot_dimension_numbers<[0], [0], [1], [1], [0, 1, 1, 1], [], []>} : vector<1x24xf32>, vector<1x24xf32>, vector<24x24xf32> -> vector<24x24xf32>
    %cst_25 = arith.constant 0.000000e+00 : f32
    %218 = vector.broadcast %cst_25 : f32 to vector<24x24xf32>
    %219 = arith.maximumf %217, %218 : vector<24x24xf32>
    %c1 = arith.constant 1 : index
    %c0_26 = arith.constant 0 : index
    %c0_27 = arith.constant 0 : index
    %220 = vector.load %arg3[%c1, %c0_26, %c0_27] : memref<2x24x24xf32, #tpu.memory_space<vmem>>, vector<1x24x24xf32>
    %221 = vector.shape_cast %220 : vector<1x24x24xf32> to vector<24x24xf32>
    %222 = vector.shape_cast %219 : vector<24x24xf32> to vector<1x24x24xf32>
    tpu.vector_store %arg3[%c1, %c0_26, %c0_27], %222 {strides = array<i32>} : memref<2x24x24xf32, #tpu.memory_space<vmem>>, vector<1x24x24xf32>,
    %cst_28 = arith.constant 0.000000e+00 : f32
    %223 = vector.broadcast %cst_28 : f32 to vector<1x8xf32>
    %224 = arith.maximumf %108, %223 : vector<1x8xf32>
    %c0_29 = arith.constant 0 : index
    %c0_30 = arith.constant 0 : index
    %c0_31 = arith.constant 0 : index
    %225 = vector.load %arg4[%c0_29, %c0_30, %c0_31] : memref<2x1x8xf32, #tpu.memory_space<vmem>>, vector<1x1x8xf32>
    %226 = vector.shape_cast %225 : vector<1x1x8xf32> to vector<1x8xf32>
    %227 = vector.shape_cast %224 : vector<1x8xf32> to vector<1x1x8xf32>
    tpu.vector_store %arg4[%c0_29, %c0_30, %c0_31], %227 {strides = array<i32>} : memref<2x1x8xf32, #tpu.memory_space<vmem>>, vector<1x1x8xf32>,
    %cst_32 = arith.constant 0.000000e+00 : f32
    %228 = vector.broadcast %cst_32 : f32 to vector<1x8xf32>
    %229 = arith.maximumf %210, %228 : vector<1x8xf32>
    %c1_33 = arith.constant 1 : index
    %c0_34 = arith.constant 0 : index
    %c0_35 = arith.constant 0 : index
    %230 = vector.load %arg4[%c1_33, %c0_34, %c0_35] : memref<2x1x8xf32, #tpu.memory_space<vmem>>, vector<1x1x8xf32>
    %231 = vector.shape_cast %230 : vector<1x1x8xf32> to vector<1x8xf32>
    %232 = vector.shape_cast %229 : vector<1x8xf32> to vector<1x1x8xf32>
    tpu.vector_store %arg4[%c1_33, %c0_34, %c0_35], %232 {strides = array<i32>} : memref<2x1x8xf32, #tpu.memory_space<vmem>>, vector<1x1x8xf32>,
    return
  }
}

</mosaic_0001>

<llo_original>
// kernel: _lambda_.1
$region0: #{_lambda_.1}
  #allocation0 [shape = 'u32[]', space=smem, size = 0x4, offset = 0x4, fixed_abs, tag = 'smem constant byte address 0x4 - core index']
  #allocation1 [shape = 'u32[144,128]{1,0:T(1,128)}', space=vmem, size = 0x12000, scoped, tag = 'internal scratch']
  %s0 = inlined_call_operand.vmem [shape: f32[1,128], index: 0, kind: input, shape index: {}]
  %s1 = inlined_call_operand.hbm [shape: f32[128,128], index: 1, kind: input, shape index: {}]
  %s2 = inlined_call_operand.hbm [shape: f32[128,768], index: 2, kind: input, shape index: {}]
  %s3 = inlined_call_operand.vmem [shape: f32[2,24,24], index: 3, kind: output, shape index: {0}]
  %s4 = inlined_call_operand.vmem [shape: f32[2,1,8], index: 4, kind: output, shape index: {1}]
  %5 = xla_tuple %s3, %s4
  %s6 = sld [smem:[#allocation0]]
  $region38: #{_lambda_.1} parent=0
    _
  %s8 = ssub.s32 1, %s6
  %s9 = scalar_select 0, %s8, %s6
  $region1: #{_lambda_.1} parent=0
    #allocation2 [shape = 'u8[65536]{0}', space=vmem, size = 0x10000, scoped, tag = 'input window, operand 1, single buffered']
    #allocation3 [shape = 's32[1]{0}', space=sflag, size = 0x4, scoped, tag = 'scoped memory for _lambda_.1']
    #allocation4 [shape = 'u8[393216]{0}', space=vmem, size = 0x60000, scoped, tag = 'input window, operand 2, single buffered']
    #allocation5 [shape = 's32[1]{0}', space=sflag, size = 0x4, scoped, tag = 'scoped memory for _lambda_.1']
    %10 = vsyncpa [#allocation3], 0
    %11 = vsyncpa [#allocation5], 0
    // Predicated region
    $region2: #{_lambda_.1} parent=1 // pred_check
      _
    $region3: #{_lambda_.1} parent=1 // pred_check_branch
      %13 = sbr.rel (0) target = $region5
    $region4: #{_lambda_.1} parent=1 // pred_region
      _
    $region5: #{_lambda_.1} parent=1 // pred_fallthru
      _
    // Predicated region
    $region6: #{_lambda_.1} parent=1 // pred_check
      _
    $region7: #{_lambda_.1} parent=1 // pred_check_branch
      %15 = sbr.rel (0) target = $region9
    $region8: #{_lambda_.1} parent=1 // pred_region
      %s17 = ssub.s32 2048, 2048
      %18 = vsyncadd [#allocation3], %s17
      %s19 = sshll.u32 [#allocation2], 4
      %s20 = int_to_ptr.vmem [resolvable:$true] %s19
      %25 = dma.hbm_to_vmem [thread:$0]  %s1, 2048, %s20, [#allocation3], 128, 128, 8
    $region9: #{_lambda_.1} parent=1 // pred_fallthru
      _
    // Predicated region
    $region10: #{_lambda_.1} parent=1 // pred_check
      _
    $region11: #{_lambda_.1} parent=1 // pred_check_branch
      %27 = sbr.rel (0) target = $region13
    $region12: #{_lambda_.1} parent=1 // pred_region
      %s29 = ssub.s32 12288, 12288
      %30 = vsyncadd [#allocation5], %s29
      %s31 = sshll.u32 [#allocation4], 4
      %s32 = int_to_ptr.vmem [resolvable:$true] %s31
      %37 = dma.hbm_to_vmem [thread:$0]  %s2, 12288, %s32, [#allocation5], 768, 768, 48
    $region13: #{_lambda_.1} parent=1 // pred_fallthru
      _
    // Predicated region
    $region14: #{_lambda_.1} parent=1 // pred_check
      _
    $region15: #{_lambda_.1} parent=1 // pred_check_branch
      %39 = sbr.rel (0) target = $region17
    $region16: #{_lambda_.1} parent=1 // pred_region
      %40 = dma.done [#allocation3], 2048
    $region17: #{_lambda_.1} parent=1 // pred_fallthru
      _
    // Predicated region
    $region18: #{_lambda_.1} parent=1 // pred_check
      _
    $region19: #{_lambda_.1} parent=1 // pred_check_branch
      %42 = sbr.rel (0) target = $region21
    $region20: #{_lambda_.1} parent=1 // pred_region
      %43 = dma.done [#allocation5], 12288
    $region21: #{_lambda_.1} parent=1 // pred_fallthru
      _
    %v44 = vld [vmem:[%s0] sm:$0x1]
    %v45 = vld [vmem:[#allocation2] sm:$0xff]
    %v46 = vld [vmem:[#allocation2 + $0x8] sm:$0xff]
    %v47 = vld [vmem:[#allocation2 + $0x10] sm:$0xff]
    %v48 = vld [vmem:[#allocation2 + $0x18] sm:$0xff]
    %v49 = vld [vmem:[#allocation2 + $0x20] sm:$0xff]
    %v50 = vld [vmem:[#allocation2 + $0x28] sm:$0xff]
    %v51 = vld [vmem:[#allocation2 + $0x30] sm:$0xff]
    %v52 = vld [vmem:[#allocation2 + $0x38] sm:$0xff]
    %v53 = vld [vmem:[#allocation2 + $0x40] sm:$0xff]
    %v54 = vld [vmem:[#allocation2 + $0x48] sm:$0xff]
    %v55 = vld [vmem:[#allocation2 + $0x50] sm:$0xff]
    %v56 = vld [vmem:[#allocation2 + $0x58] sm:$0xff]
    %v57 = vld [vmem:[#allocation2 + $0x60] sm:$0xff]
    %v58 = vld [vmem:[#allocation2 + $0x68] sm:$0xff]
    %v59 = vld [vmem:[#allocation2 + $0x70] sm:$0xff]
    %v60 = vld [vmem:[#allocation2 + $0x78] sm:$0xff]
    %61 = vmatprep.subr.mxu0 0.0
    %62 = vmatpush1.msra.mxu0 %v60
    %63 = vmatprep.subr.mxu0 0.0
    %64 = vmatpush1.msra.mxu0 %v59
    %65 = vmatprep.subr.mxu0 0.0
    %66 = vmatpush1.msra.mxu0 %v58
    %67 = vmatprep.subr.mxu0 0.0
    %68 = vmatpush1.msra.mxu0 %v57
    %69 = vmatprep.subr.mxu0 0.0
    %70 = vmatpush1.msra.mxu0 %v56
    %71 = vmatprep.subr.mxu0 0.0
    %72 = vmatpush1.msra.mxu0 %v55
    %73 = vmatprep.subr.mxu0 0.0
    %74 = vmatpush1.msra.mxu0 %v54
    %75 = vmatprep.subr.mxu0 0.0
    %76 = vmatpush1.msra.mxu0 %v53
    %77 = vmatprep.subr.mxu0 0.0
    %78 = vmatpush1.msra.mxu0 %v52
    %79 = vmatprep.subr.mxu0 0.0
    %80 = vmatpush1.msra.mxu0 %v51
    %81 = vmatprep.subr.mxu0 0.0
    %82 = vmatpush1.msra.mxu0 %v50
    %83 = vmatprep.subr.mxu0 0.0
    %84 = vmatpush1.msra.mxu0 %v49
    %85 = vmatprep.subr.mxu0 0.0
    %86 = vmatpush1.msra.mxu0 %v48
    %87 = vmatprep.subr.mxu0 0.0
    %88 = vmatpush1.msra.mxu0 %v47
    %89 = vmatprep.subr.mxu0 0.0
    %90 = vmatpush1.msra.mxu0 %v46
    %91 = vmatprep.subr.mxu0 0.0
    %92 = vmatpush1.msra.mxu0 %v45
    %93 = vmatprep.subr.mxu0 0.0
    %94 = vmatpush2.msra.mxu0 0.0
    %95 = vmatprep.subr.mxu0 0.0
    %96 = vmatpush2.msra.mxu0 0.0
    %97 = vmatprep.subr.mxu0 0.0
    %98 = vmatpush2.msra.mxu0 0.0
    %99 = vmatprep.subr.mxu0 0.0
    %100 = vmatpush2.msra.mxu0 0.0
    %101 = vmatprep.subr.mxu0 0.0
    %102 = vmatpush2.msra.mxu0 0.0
    %103 = vmatprep.subr.mxu0 0.0
    %104 = vmatpush2.msra.mxu0 0.0
    %105 = vmatprep.subr.mxu0 0.0
    %106 = vmatpush2.msra.mxu0 0.0
    %107 = vmatprep.subr.mxu0 0.0
    %108 = vmatpush2.msra.mxu0 0.0
    %109 = vmatprep.subr.mxu0 0.0
    %110 = vmatpush2.msra.mxu0 0.0
    %111 = vmatprep.subr.mxu0 0.0
    %112 = vmatpush2.msra.mxu0 0.0
    %113 = vmatprep.subr.mxu0 0.0
    %114 = vmatpush2.msra.mxu0 0.0
    %115 = vmatprep.subr.mxu0 0.0
    %116 = vmatpush2.msra.mxu0 0.0
    %117 = vmatprep.subr.mxu0 0.0
    %118 = vmatpush2.msra.mxu0 0.0
    %119 = vmatprep.subr.mxu0 0.0
    %120 = vmatpush2.msra.mxu0 0.0
    %121 = vmatprep.subr.mxu0 0.0
    %122 = vmatpush2.msra.mxu0 0.0
    %123 = vmatprep.subr.mxu0 0.0
    %124 = vmatpush2.msra.mxu0 0.0
    %125 = vmatprep.mubr.f32.mxu0 0.0
    %126 = vmatmul.mubr.f32.gmra.mxu0 %v44
    %v127 = vpop.f32.mrf.mxu0
    %v128 = vadd.f32 0.0, %v127
    %v129 = vpop.f32.mrf.mxu0
    %130 = vdwg.mxu0
    %v131 = vmax.f32 %v128, 0.0
    %v132 = vld [vmem:[#allocation4] sm:$0xff]
    %v133 = vld [vmem:[#allocation4 + $0x8] sm:$0xff]
    %v134 = vld [vmem:[#allocation4 + $0x10] sm:$0xff]
    %v135 = vld [vmem:[#allocation4 + $0x18] sm:$0xff]
    %v136 = vld [vmem:[#allocation4 + $0x20] sm:$0xff]
    %v137 = vld [vmem:[#allocation4 + $0x28] sm:$0xff]
    %v138 = vld [vmem:[#allocation4 + $0x30] sm:$0xff]
    %v139 = vld [vmem:[#allocation4 + $0x38] sm:$0xff]
    %v140 = vld [vmem:[#allocation4 + $0x40] sm:$0xff]
    %v141 = vld [vmem:[#allocation4 + $0x48] sm:$0xff]
    %v142 = vld [vmem:[#allocation4 + $0x50] sm:$0xff]
    %v143 = vld [vmem:[#allocation4 + $0x58] sm:$0xff]
    %v144 = vld [vmem:[#allocation4 + $0x60] sm:$0xff]
    %v145 = vld [vmem:[#allocation4 + $0x68] sm:$0xff]
    %v146 = vld [vmem:[#allocation4 + $0x70] sm:$0xff]
    %v147 = vld [vmem:[#allocation4 + $0x78] sm:$0xff]
    %v148 = vld [vmem:[#allocation4 + $0x80] sm:$0xff]
    %v149 = vld [vmem:[#allocation4 + $0x88] sm:$0xff]
    %v150 = vld [vmem:[#allocation4 + $0x90] sm:$0xff]
    %v151 = vld [vmem:[#allocation4 + $0x98] sm:$0xff]
    %v152 = vld [vmem:[#allocation4 + $0xa0] sm:$0xff]
    %v153 = vld [vmem:[#allocation4 + $0xa8] sm:$0xff]
    %v154 = vld [vmem:[#allocation4 + $0xb0] sm:$0xff]
    %v155 = vld [vmem:[#allocation4 + $0xb8] sm:$0xff]
    %v156 = vld [vmem:[#allocation4 + $0xc0] sm:$0xff]
    %v157 = vld [vmem:[#allocation4 + $0xc8] sm:$0xff]
    %v158 = vld [vmem:[#allocation4 + $0xd0] sm:$0xff]
    %v159 = vld [vmem:[#allocation4 + $0xd8] sm:$0xff]
    %v160 = vld [vmem:[#allocation4 + $0xe0] sm:$0xff]
    %v161 = vld [vmem:[#allocation4 + $0xe8] sm:$0xff]
    %v162 = vld [vmem:[#allocation4 + $0xf0] sm:$0xff]
    %v163 = vld [vmem:[#allocation4 + $0xf8] sm:$0xff]
    %v164 = vld [vmem:[#allocation4 + $0x100] sm:$0xff]
    %v165 = vld [vmem:[#allocation4 + $0x108] sm:$0xff]
    %v166 = vld [vmem:[#allocation4 + $0x110] sm:$0xff]
    %v167 = vld [vmem:[#allocation4 + $0x118] sm:$0xff]
    %v168 = vld [vmem:[#allocation4 + $0x120] sm:$0xff]
    %v169 = vld [vmem:[#allocation4 + $0x128] sm:$0xff]
    %v170 = vld [vmem:[#allocation4 + $0x130] sm:$0xff]
    %v171 = vld [vmem:[#allocation4 + $0x138] sm:$0xff]
    %v172 = vld [vmem:[#allocation4 + $0x140] sm:$0xff]
    %v173 = vld [vmem:[#allocation4 + $0x148] sm:$0xff]
    %v174 = vld [vmem:[#allocation4 + $0x150] sm:$0xff]
    %v175 = vld [vmem:[#allocation4 + $0x158] sm:$0xff]
    %v176 = vld [vmem:[#allocation4 + $0x160] sm:$0xff]
    %v177 = vld [vmem:[#allocation4 + $0x168] sm:$0xff]
    %v178 = vld [vmem:[#allocation4 + $0x170] sm:$0xff]
    %v179 = vld [vmem:[#allocation4 + $0x178] sm:$0xff]
    %v180 = vld [vmem:[#allocation4 + $0x180] sm:$0xff]
    %v181 = vld [vmem:[#allocation4 + $0x188] sm:$0xff]
    %v182 = vld [vmem:[#allocation4 + $0x190] sm:$0xff]
    %v183 = vld [vmem:[#allocation4 + $0x198] sm:$0xff]
    %v184 = vld [vmem:[#allocation4 + $0x1a0] sm:$0xff]
    %v185 = vld [vmem:[#allocation4 + $0x1a8] sm:$0xff]
    %v186 = vld [vmem:[#allocation4 + $0x1b0] sm:$0xff]
    %v187 = vld [vmem:[#allocation4 + $0x1b8] sm:$0xff]
    %v188 = vld [vmem:[#allocation4 + $0x1c0] sm:$0xff]
    %v189 = vld [vmem:[#allocation4 + $0x1c8] sm:$0xff]
    %v190 = vld [vmem:[#allocation4 + $0x1d0] sm:$0xff]
    %v191 = vld [vmem:[#allocation4 + $0x1d8] sm:$0xff]
    %v192 = vld [vmem:[#allocation4 + $0x1e0] sm:$0xff]
    %v193 = vld [vmem:[#allocation4 + $0x1e8] sm:$0xff]
    %v194 = vld [vmem:[#allocation4 + $0x1f0] sm:$0xff]
    %v195 = vld [vmem:[#allocation4 + $0x1f8] sm:$0xff]
    %v196 = vld [vmem:[#allocation4 + $0x200] sm:$0xff]
    %v197 = vld [vmem:[#allocation4 + $0x208] sm:$0xff]
    %v198 = vld [vmem:[#allocation4 + $0x210] sm:$0xff]
    %v199 = vld [vmem:[#allocation4 + $0x218] sm:$0xff]
    %v200 = vld [vmem:[#allocation4 + $0x220] sm:$0xff]
    %v201 = vld [vmem:[#allocation4 + $0x228] sm:$0xff]
    %v202 = vld [vmem:[#allocation4 + $0x230] sm:$0xff]
    %v203 = vld [vmem:[#allocation4 + $0x238] sm:$0xff]
    %v204 = vld [vmem:[#allocation4 + $0x240] sm:$0xff]
    %v205 = vld [vmem:[#allocation4 + $0x248] sm:$0xff]
    %v206 = vld [vmem:[#allocation4 + $0x250] sm:$0xff]
    %v207 = vld [vmem:[#allocation4 + $0x258] sm:$0xff]
    %v208 = vld [vmem:[#allocation4 + $0x260] sm:$0xff]
    %v209 = vld [vmem:[#allocation4 + $0x268] sm:$0xff]
    %v210 = vld [vmem:[#allocation4 + $0x270] sm:$0xff]
    %v211 = vld [vmem:[#allocation4 + $0x278] sm:$0xff]
    %v212 = vld [vmem:[#allocation4 + $0x280] sm:$0xff]
    %v213 = vld [vmem:[#allocation4 + $0x288] sm:$0xff]
    %v214 = vld [vmem:[#allocation4 + $0x290] sm:$0xff]
    %v215 = vld [vmem:[#allocation4 + $0x298] sm:$0xff]
    %v216 = vld [vmem:[#allocation4 + $0x2a0] sm:$0xff]
    %v217 = vld [vmem:[#allocation4 + $0x2a8] sm:$0xff]
    %v218 = vld [vmem:[#allocation4 + $0x2b0] sm:$0xff]
    %v219 = vld [vmem:[#allocation4 + $0x2b8] sm:$0xff]
    %v220 = vld [vmem:[#allocation4 + $0x2c0] sm:$0xff]
    %v221 = vld [vmem:[#allocation4 + $0x2c8] sm:$0xff]
    %v222 = vld [vmem:[#allocation4 + $0x2d0] sm:$0xff]
    %v223 = vld [vmem:[#allocation4 + $0x2d8] sm:$0xff]
    %v224 = vld [vmem:[#allocation4 + $0x2e0] sm:$0xff]
    %v225 = vld [vmem:[#allocation4 + $0x2e8] sm:$0xff]
    %v226 = vld [vmem:[#allocation4 + $0x2f0] sm:$0xff]
    %v227 = vld [vmem:[#allocation4 + $0x2f8] sm:$0xff]
    %228 = vmatprep.subr.mxu0 %v223
    %229 = vmatpush1.msra.mxu0 %v222
    %230 = vmatprep.subr.mxu0 %v217
    %231 = vmatpush1.msra.mxu0 %v216
    %232 = vmatprep.subr.mxu0 %v211
    %233 = vmatpush1.msra.mxu0 %v210
    %234 = vmatprep.subr.mxu0 %v205
    %235 = vmatpush1.msra.mxu0 %v204
    %236 = vmatprep.subr.mxu0 %v199
    %237 = vmatpush1.msra.mxu0 %v198
    %238 = vmatprep.subr.mxu0 %v193
    %239 = vmatpush1.msra.mxu0 %v192
    %240 = vmatprep.subr.mxu0 %v187
    %241 = vmatpush1.msra.mxu0 %v186
    %242 = vmatprep.subr.mxu0 %v181
    %243 = vmatpush1.msra.mxu0 %v180
    %244 = vmatprep.subr.mxu0 %v175
    %245 = vmatpush1.msra.mxu0 %v174
    %246 = vmatprep.subr.mxu0 %v169
    %247 = vmatpush1.msra.mxu0 %v168
    %248 = vmatprep.subr.mxu0 %v163
    %249 = vmatpush1.msra.mxu0 %v162
    %250 = vmatprep.subr.mxu0 %v157
    %251 = vmatpush1.msra.mxu0 %v156
    %252 = vmatprep.subr.mxu0 %v151
    %253 = vmatpush1.msra.mxu0 %v150
    %254 = vmatprep.subr.mxu0 %v145
    %255 = vmatpush1.msra.mxu0 %v144
    %256 = vmatprep.subr.mxu0 %v139
    %257 = vmatpush1.msra.mxu0 %v138
    %258 = vmatprep.subr.mxu0 %v133
    %259 = vmatpush1.msra.mxu0 %v132
    %260 = vmatprep.subr.mxu0 0.0
    %261 = vmatpush2.msra.mxu0 0.0
    %262 = vmatprep.subr.mxu0 0.0
    %263 = vmatpush2.msra.mxu0 0.0
    %264 = vmatprep.subr.mxu0 0.0
    %265 = vmatpush2.msra.mxu0 0.0
    %266 = vmatprep.subr.mxu0 0.0
    %267 = vmatpush2.msra.mxu0 0.0
    %268 = vmatprep.subr.mxu0 0.0
    %269 = vmatpush2.msra.mxu0 0.0
    %270 = vmatprep.subr.mxu0 0.0
    %271 = vmatpush2.msra.mxu0 0.0
    %272 = vmatprep.subr.mxu0 0.0
    %273 = vmatpush2.msra.mxu0 0.0
    %274 = vmatprep.subr.mxu0 0.0
    %275 = vmatpush2.msra.mxu0 0.0
    %276 = vmatprep.subr.mxu0 0.0
    %277 = vmatpush2.msra.mxu0 0.0
    %278 = vmatprep.subr.mxu0 0.0
    %279 = vmatpush2.msra.mxu0 0.0
    %280 = vmatprep.subr.mxu0 0.0
    %281 = vmatpush2.msra.mxu0 0.0
    %282 = vmatprep.subr.mxu0 0.0
    %283 = vmatpush2.msra.mxu0 0.0
    %284 = vmatprep.subr.mxu0 0.0
    %285 = vmatpush2.msra.mxu0 0.0
    %286 = vmatprep.subr.mxu0 0.0
    %287 = vmatpush2.msra.mxu0 0.0
    %288 = vmatprep.subr.mxu0 0.0
    %289 = vmatpush2.msra.mxu0 0.0
    %290 = vmatprep.subr.mxu0 0.0
    %291 = vmatpush2.msra.mxu0 0.0
    %292 = vmatprep.mubr.f32.mxu0 0.0
    %293 = vmatmul.mubr.f32.gmra.mxu0 %v131
    %v294 = vpop.f32.mrf.mxu0
    %v295 = vadd.f32 0.0, %v294
    %v296 = vpop.f32.mrf.mxu0
    %v297 = vadd.f32 0.0, %v296
    %298 = vdwg.mxu0
    %299 = vmatprep.subr.mxu0 %v225
    %300 = vmatpush1.msra.mxu0 %v224
    %301 = vmatprep.subr.mxu0 %v219
    %302 = vmatpush1.msra.mxu0 %v218
    %303 = vmatprep.subr.mxu0 %v213
    %304 = vmatpush1.msra.mxu0 %v212
    %305 = vmatprep.subr.mxu0 %v207
    %306 = vmatpush1.msra.mxu0 %v206
    %307 = vmatprep.subr.mxu0 %v201
    %308 = vmatpush1.msra.mxu0 %v200
    %309 = vmatprep.subr.mxu0 %v195
    %310 = vmatpush1.msra.mxu0 %v194
    %311 = vmatprep.subr.mxu0 %v189
    %312 = vmatpush1.msra.mxu0 %v188
    %313 = vmatprep.subr.mxu0 %v183
    %314 = vmatpush1.msra.mxu0 %v182
    %315 = vmatprep.subr.mxu0 %v177
    %316 = vmatpush1.msra.mxu0 %v176
    %317 = vmatprep.subr.mxu0 %v171
    %318 = vmatpush1.msra.mxu0 %v170
    %319 = vmatprep.subr.mxu0 %v165
    %320 = vmatpush1.msra.mxu0 %v164
    %321 = vmatprep.subr.mxu0 %v159
    %322 = vmatpush1.msra.mxu0 %v158
    %323 = vmatprep.subr.mxu0 %v153
    %324 = vmatpush1.msra.mxu0 %v152
    %325 = vmatprep.subr.mxu0 %v147
    %326 = vmatpush1.msra.mxu0 %v146
    %327 = vmatprep.subr.mxu0 %v141
    %328 = vmatpush1.msra.mxu0 %v140
    %329 = vmatprep.subr.mxu0 %v135
    %330 = vmatpush1.msra.mxu0 %v134
    %331 = vmatprep.subr.mxu0 0.0
    %332 = vmatpush2.msra.mxu0 0.0
    %333 = vmatprep.subr.mxu0 0.0
    %334 = vmatpush2.msra.mxu0 0.0
    %335 = vmatprep.subr.mxu0 0.0
    %336 = vmatpush2.msra.mxu0 0.0
    %337 = vmatprep.subr.mxu0 0.0
    %338 = vmatpush2.msra.mxu0 0.0
    %339 = vmatprep.subr.mxu0 0.0
    %340 = vmatpush2.msra.mxu0 0.0
    %341 = vmatprep.subr.mxu0 0.0
    %342 = vmatpush2.msra.mxu0 0.0
    %343 = vmatprep.subr.mxu0 0.0
    %344 = vmatpush2.msra.mxu0 0.0
    %345 = vmatprep.subr.mxu0 0.0
    %346 = vmatpush2.msra.mxu0 0.0
    %347 = vmatprep.subr.mxu0 0.0
    %348 = vmatpush2.msra.mxu0 0.0
    %349 = vmatprep.subr.mxu0 0.0
    %350 = vmatpush2.msra.mxu0 0.0
    %351 = vmatprep.subr.mxu0 0.0
    %352 = vmatpush2.msra.mxu0 0.0
    %353 = vmatprep.subr.mxu0 0.0
    %354 = vmatpush2.msra.mxu0 0.0
    %355 = vmatprep.subr.mxu0 0.0
    %356 = vmatpush2.msra.mxu0 0.0
    %357 = vmatprep.subr.mxu0 0.0
    %358 = vmatpush2.msra.mxu0 0.0
    %359 = vmatprep.subr.mxu0 0.0
    %360 = vmatpush2.msra.mxu0 0.0
    %361 = vmatprep.subr.mxu0 0.0
    %362 = vmatpush2.msra.mxu0 0.0
    %363 = vmatprep.mubr.f32.mxu0 0.0
    %364 = vmatmul.mubr.f32.gmra.mxu0 %v131
    %v365 = vpop.f32.mrf.mxu0
    %v366 = vadd.f32 0.0, %v365
    %v367 = vpop.f32.mrf.mxu0
    %v368 = vadd.f32 0.0, %v367
    %369 = vdwg.mxu0
    %370 = vmatprep.subr.mxu0 %v227
    %371 = vmatpush1.msra.mxu0 %v226
    %372 = vmatprep.subr.mxu0 %v221
    %373 = vmatpush1.msra.mxu0 %v220
    %374 = vmatprep.subr.mxu0 %v215
    %375 = vmatpush1.msra.mxu0 %v214
    %376 = vmatprep.subr.mxu0 %v209
    %377 = vmatpush1.msra.mxu0 %v208
    %378 = vmatprep.subr.mxu0 %v203
    %379 = vmatpush1.msra.mxu0 %v202
    %380 = vmatprep.subr.mxu0 %v197
    %381 = vmatpush1.msra.mxu0 %v196
    %382 = vmatprep.subr.mxu0 %v191
    %383 = vmatpush1.msra.mxu0 %v190
    %384 = vmatprep.subr.mxu0 %v185
    %385 = vmatpush1.msra.mxu0 %v184
    %386 = vmatprep.subr.mxu0 %v179
    %387 = vmatpush1.msra.mxu0 %v178
    %388 = vmatprep.subr.mxu0 %v173
    %389 = vmatpush1.msra.mxu0 %v172
    %390 = vmatprep.subr.mxu0 %v167
    %391 = vmatpush1.msra.mxu0 %v166
    %392 = vmatprep.subr.mxu0 %v161
    %393 = vmatpush1.msra.mxu0 %v160
    %394 = vmatprep.subr.mxu0 %v155
    %395 = vmatpush1.msra.mxu0 %v154
    %396 = vmatprep.subr.mxu0 %v149
    %397 = vmatpush1.msra.mxu0 %v148
    %398 = vmatprep.subr.mxu0 %v143
    %399 = vmatpush1.msra.mxu0 %v142
    %400 = vmatprep.subr.mxu0 %v137
    %401 = vmatpush1.msra.mxu0 %v136
    %402 = vmatprep.subr.mxu0 0.0
    %403 = vmatpush2.msra.mxu0 0.0
    %404 = vmatprep.subr.mxu0 0.0
    %405 = vmatpush2.msra.mxu0 0.0
    %406 = vmatprep.subr.mxu0 0.0
    %407 = vmatpush2.msra.mxu0 0.0
    %408 = vmatprep.subr.mxu0 0.0
    %409 = vmatpush2.msra.mxu0 0.0
    %410 = vmatprep.subr.mxu0 0.0
    %411 = vmatpush2.msra.mxu0 0.0
    %412 = vmatprep.subr.mxu0 0.0
    %413 = vmatpush2.msra.mxu0 0.0
    %414 = vmatprep.subr.mxu0 0.0
    %415 = vmatpush2.msra.mxu0 0.0
    %416 = vmatprep.subr.mxu0 0.0
    %417 = vmatpush2.msra.mxu0 0.0
    %418 = vmatprep.subr.mxu0 0.0
    %419 = vmatpush2.msra.mxu0 0.0
    %420 = vmatprep.subr.mxu0 0.0
    %421 = vmatpush2.msra.mxu0 0.0
    %422 = vmatprep.subr.mxu0 0.0
    %423 = vmatpush2.msra.mxu0 0.0
    %424 = vmatprep.subr.mxu0 0.0
    %425 = vmatpush2.msra.mxu0 0.0
    %426 = vmatprep.subr.mxu0 0.0
    %427 = vmatpush2.msra.mxu0 0.0
    %428 = vmatprep.subr.mxu0 0.0
    %429 = vmatpush2.msra.mxu0 0.0
    %430 = vmatprep.subr.mxu0 0.0
    %431 = vmatpush2.msra.mxu0 0.0
    %432 = vmatprep.subr.mxu0 0.0
    %433 = vmatpush2.msra.mxu0 0.0
    %434 = vmatprep.mubr.f32.mxu0 0.0
    %435 = vmatmul.mubr.f32.gmra.mxu0 %v131
    %v436 = vpop.f32.mrf.mxu0
    %v437 = vadd.f32 0.0, %v436
    %v438 = vpop.f32.mrf.mxu0
    %v439 = vadd.f32 0.0, %v438
    %440 = vdwg.mxu0
    %vm441 = vcmask 32768
    %v442 = vsel %vm441, %v295, -inf
    %443 = vmax.xlane.f32.xlu0 %v442
    %v444 = vpop.xlane.xlu0 %443
    %v445 = vsub.f32 %v295, %v444
    %v446 = vmul.f32 %v445, 1.442695
    %v447 = vpow.pop %v446
    %v448 = vsel %vm441, %v447, 0.0
    %449 = vadd.xlane.f32.xlu0 %v448
    %v450 = vpop.xlane.xlu0 %449
    %v451 = vrcp.pop %v450
    %v452 = vmul.f32 %v447, %v451
    %454 = vset.pattern.permute.xlu0 0
    %455 = vperm.xlu0 %454, %v452
    %v456 = vpop.permute.xlu0 %455
    %v458 = vmul.f32 %v456, %v295
    %459 = vset.pattern.permute.xlu0 1
    %460 = vperm.xlu0 %459, %v452
    %v461 = vpop.permute.xlu0 %460
    %v463 = vmul.f32 %v461, %v295
    %465 = vrot.lane.b32.xlu0 %v463, 104
    %v466 = vpop.permute.xlu0 %465
    %v468 = vadd.f32 %v458, %v466
    %469 = vset.pattern.permute.xlu0 2
    %470 = vperm.xlu0 %469, %v452
    %v471 = vpop.permute.xlu0 %470
    %v473 = vmul.f32 %v471, %v295
    %475 = vrot.lane.b32.xlu0 %v473, 80
    %v476 = vpop.permute.xlu0 %475
    %v478 = vadd.f32 %v468, %v476
    %479 = vset.pattern.permute.xlu0 3
    %480 = vperm.xlu0 %479, %v452
    %v481 = vpop.permute.xlu0 %480
    %v483 = vmul.f32 %v481, %v295
    %485 = vrot.lane.b32.xlu0 %v483, 56
    %v486 = vpop.permute.xlu0 %485
    %v488 = vadd.f32 %v478, %v486
    %489 = vset.pattern.permute.xlu0 4
    %490 = vperm.xlu0 %489, %v452
    %v491 = vpop.permute.xlu0 %490
    %v493 = vmul.f32 %v491, %v295
    %495 = vrot.lane.b32.xlu0 %v493, 32
    %v496 = vpop.permute.xlu0 %495
    %v498 = vadd.f32 %v488, %v496
    %v499 = vsel %vm441, %v297, -inf
    %500 = vmax.xlane.f32.xlu0 %v499
    %v501 = vpop.xlane.xlu0 %500
    %v502 = vsub.f32 %v297, %v501
    %v503 = vmul.f32 %v502, 1.442695
    %v504 = vpow.pop %v503
    %v505 = vsel %vm441, %v504, 0.0
    %506 = vadd.xlane.f32.xlu0 %v505
    %v507 = vpop.xlane.xlu0 %506
    %v508 = vrcp.pop %v507
    %v509 = vmul.f32 %v504, %v508
    %511 = vset.pattern.permute.xlu0 0
    %512 = vperm.xlu0 %511, %v509
    %v513 = vpop.permute.xlu0 %512
    %v515 = vmul.f32 %v513, %v297
    %516 = vset.pattern.permute.xlu0 1
    %517 = vperm.xlu0 %516, %v509
    %v518 = vpop.permute.xlu0 %517
    %v520 = vmul.f32 %v518, %v297
    %522 = vrot.lane.b32.xlu0 %v520, 104
    %v523 = vpop.permute.xlu0 %522
    %v525 = vadd.f32 %v515, %v523
    %526 = vset.pattern.permute.xlu0 2
    %527 = vperm.xlu0 %526, %v509
    %v528 = vpop.permute.xlu0 %527
    %v530 = vmul.f32 %v528, %v297
    %532 = vrot.lane.b32.xlu0 %v530, 80
    %v533 = vpop.permute.xlu0 %532
    %v535 = vadd.f32 %v525, %v533
    %536 = vset.pattern.permute.xlu0 3
    %537 = vperm.xlu0 %536, %v509
    %v538 = vpop.permute.xlu0 %537
    %v540 = vmul.f32 %v538, %v297
    %542 = vrot.lane.b32.xlu0 %v540, 56
    %v543 = vpop.permute.xlu0 %542
    %v545 = vadd.f32 %v535, %v543
    %546 = vset.pattern.permute.xlu0 4
    %547 = vperm.xlu0 %546, %v509
    %v548 = vpop.permute.xlu0 %547
    %v550 = vmul.f32 %v548, %v297
    %552 = vrot.lane.b32.xlu0 %v550, 32
    %v553 = vpop.permute.xlu0 %552
    %v555 = vadd.f32 %v545, %v553
    %v556 = vsel %vm441, %v366, -inf
    %557 = vmax.xlane.f32.xlu0 %v556
    %v558 = vpop.xlane.xlu0 %557
    %v559 = vsub.f32 %v366, %v558
    %v560 = vmul.f32 %v559, 1.442695
    %v561 = vpow.pop %v560
    %v562 = vsel %vm441, %v561, 0.0
    %563 = vadd.xlane.f32.xlu0 %v562
    %v564 = vpop.xlane.xlu0 %563
    %v565 = vrcp.pop %v564
    %v566 = vmul.f32 %v561, %v565
    %568 = vset.pattern.permute.xlu0 0
    %569 = vperm.xlu0 %568, %v566
    %v570 = vpop.permute.xlu0 %569
    %v572 = vmul.f32 %v570, %v366
    %573 = vset.pattern.permute.xlu0 1
    %574 = vperm.xlu0 %573, %v566
    %v575 = vpop.permute.xlu0 %574
    %v577 = vmul.f32 %v575, %v366
    %579 = vrot.lane.b32.xlu0 %v577, 120
    %v580 = vpop.permute.xlu0 %579
    %v582 = vadd.f32 %v572, %v580
    %583 = vset.pattern.permute.xlu0 2
    %584 = vperm.xlu0 %583, %v566
    %v585 = vpop.permute.xlu0 %584
    %v587 = vmul.f32 %v585, %v366
    %589 = vrot.lane.b32.xlu0 %v587, 112
    %v590 = vpop.permute.xlu0 %589
    %v592 = vadd.f32 %v582, %v590
    %593 = vset.pattern.permute.xlu0 3
    %594 = vperm.xlu0 %593, %v566
    %v595 = vpop.permute.xlu0 %594
    %v597 = vmul.f32 %v595, %v366
    %599 = vrot.lane.b32.xlu0 %v597, 104
    %v600 = vpop.permute.xlu0 %599
    %v602 = vadd.f32 %v592, %v600
    %603 = vset.pattern.permute.xlu0 4
    %604 = vperm.xlu0 %603, %v566
    %v605 = vpop.permute.xlu0 %604
    %v607 = vmul.f32 %v605, %v366
    %609 = vrot.lane.b32.xlu0 %v607, 96
    %v610 = vpop.permute.xlu0 %609
    %v612 = vadd.f32 %v602, %v610
    %v613 = vsel %vm441, %v368, -inf
    %614 = vmax.xlane.f32.xlu0 %v613
    %v615 = vpop.xlane.xlu0 %614
    %v616 = vsub.f32 %v368, %v615
    %v617 = vmul.f32 %v616, 1.442695
    %v618 = vpow.pop %v617
    %v619 = vsel %vm441, %v618, 0.0
    %620 = vadd.xlane.f32.xlu0 %v619
    %v621 = vpop.xlane.xlu0 %620
    %v622 = vrcp.pop %v621
    %v623 = vmul.f32 %v618, %v622
    %625 = vset.pattern.permute.xlu0 0
    %626 = vperm.xlu0 %625, %v623
    %v627 = vpop.permute.xlu0 %626
    %v629 = vmul.f32 %v627, %v368
    %630 = vset.pattern.permute.xlu0 1
    %631 = vperm.xlu0 %630, %v623
    %v632 = vpop.permute.xlu0 %631
    %v634 = vmul.f32 %v632, %v368
    %636 = vrot.lane.b32.xlu0 %v634, 104
    %v637 = vpop.permute.xlu0 %636
    %v639 = vadd.f32 %v629, %v637
    %640 = vset.pattern.permute.xlu0 2
    %641 = vperm.xlu0 %640, %v623
    %v642 = vpop.permute.xlu0 %641
    %v644 = vmul.f32 %v642, %v368
    %646 = vrot.lane.b32.xlu0 %v644, 80
    %v647 = vpop.permute.xlu0 %646
    %v649 = vadd.f32 %v639, %v647
    %650 = vset.pattern.permute.xlu0 3
    %651 = vperm.xlu0 %650, %v623
    %v652 = vpop.permute.xlu0 %651
    %v654 = vmul.f32 %v652, %v368
    %656 = vrot.lane.b32.xlu0 %v654, 56
    %v657 = vpop.permute.xlu0 %656
    %v659 = vadd.f32 %v649, %v657
    %660 = vset.pattern.permute.xlu0 4
    %661 = vperm.xlu0 %660, %v623
    %v662 = vpop.permute.xlu0 %661
    %v664 = vmul.f32 %v662, %v368
    %666 = vrot.lane.b32.xlu0 %v664, 32
    %v667 = vpop.permute.xlu0 %666
    %v669 = vadd.f32 %v659, %v667
    %v670 = vsel %vm441, %v437, -inf
    %671 = vmax.xlane.f32.xlu0 %v670
    %v672 = vpop.xlane.xlu0 %671
    %v673 = vsub.f32 %v437, %v672
    %v674 = vmul.f32 %v673, 1.442695
    %v675 = vpow.pop %v674
    %v676 = vsel %vm441, %v675, 0.0
    %677 = vadd.xlane.f32.xlu0 %v676
    %v678 = vpop.xlane.xlu0 %677
    %v679 = vrcp.pop %v678
    %v680 = vmul.f32 %v675, %v679
    %682 = vset.pattern.permute.xlu0 0
    %683 = vperm.xlu0 %682, %v680
    %v684 = vpop.permute.xlu0 %683
    %v686 = vmul.f32 %v684, %v437
    %687 = vset.pattern.permute.xlu0 1
    %688 = vperm.xlu0 %687, %v680
    %v689 = vpop.permute.xlu0 %688
    %v691 = vmul.f32 %v689, %v437
    %693 = vrot.lane.b32.xlu0 %v691, 104
    %v694 = vpop.permute.xlu0 %693
    %v696 = vadd.f32 %v686, %v694
    %697 = vset.pattern.permute.xlu0 2
    %698 = vperm.xlu0 %697, %v680
    %v699 = vpop.permute.xlu0 %698
    %v701 = vmul.f32 %v699, %v437
    %703 = vrot.lane.b32.xlu0 %v701, 80
    %v704 = vpop.permute.xlu0 %703
    %v706 = vadd.f32 %v696, %v704
    %707 = vset.pattern.permute.xlu0 3
    %708 = vperm.xlu0 %707, %v680
    %v709 = vpop.permute.xlu0 %708
    %v711 = vmul.f32 %v709, %v437
    %713 = vrot.lane.b32.xlu0 %v711, 56
    %v714 = vpop.permute.xlu0 %713
    %v716 = vadd.f32 %v706, %v714
    %717 = vset.pattern.permute.xlu0 4
    %718 = vperm.xlu0 %717, %v680
    %v719 = vpop.permute.xlu0 %718
    %v721 = vmul.f32 %v719, %v437
    %723 = vrot.lane.b32.xlu0 %v721, 32
    %v724 = vpop.permute.xlu0 %723
    %v726 = vadd.f32 %v716, %v724
    %v727 = vsel %vm441, %v439, -inf
    %728 = vmax.xlane.f32.xlu0 %v727
    %v729 = vpop.xlane.xlu0 %728
    %v730 = vsub.f32 %v439, %v729
    %v731 = vmul.f32 %v730, 1.442695
    %v732 = vpow.pop %v731
    %v733 = vsel %vm441, %v732, 0.0
    %734 = vadd.xlane.f32.xlu0 %v733
    %v735 = vpop.xlane.xlu0 %734
    %v736 = vrcp.pop %v735
    %v737 = vmul.f32 %v732, %v736
    %739 = vset.pattern.permute.xlu0 0
    %740 = vperm.xlu0 %739, %v737
    %v741 = vpop.permute.xlu0 %740
    %v743 = vmul.f32 %v741, %v439
    %744 = vset.pattern.permute.xlu0 1
    %745 = vperm.xlu0 %744, %v737
    %v746 = vpop.permute.xlu0 %745
    %v748 = vmul.f32 %v746, %v439
    %750 = vrot.lane.b32.xlu0 %v748, 120
    %v751 = vpop.permute.xlu0 %750
    %v753 = vadd.f32 %v743, %v751
    %754 = vset.pattern.permute.xlu0 2
    %755 = vperm.xlu0 %754, %v737
    %v756 = vpop.permute.xlu0 %755
    %v758 = vmul.f32 %v756, %v439
    %760 = vrot.lane.b32.xlu0 %v758, 112
    %v761 = vpop.permute.xlu0 %760
    %v763 = vadd.f32 %v753, %v761
    %764 = vset.pattern.permute.xlu0 3
    %765 = vperm.xlu0 %764, %v737
    %v766 = vpop.permute.xlu0 %765
    %v768 = vmul.f32 %v766, %v439
    %770 = vrot.lane.b32.xlu0 %v768, 104
    %v771 = vpop.permute.xlu0 %770
    %v773 = vadd.f32 %v763, %v771
    %774 = vset.pattern.permute.xlu0 4
    %775 = vperm.xlu0 %774, %v737
    %v776 = vpop.permute.xlu0 %775
    %v778 = vmul.f32 %v776, %v439
    %780 = vrot.lane.b32.xlu0 %v778, 96
    %v781 = vpop.permute.xlu0 %780
    %v783 = vadd.f32 %v773, %v781
    %785 = vrot.lane.b32.xlu0 %v498, 123
    %v786 = vpop.permute.xlu0 %785
    %788 = vxpose.xlu0.b32.start [1/16] %v786, 128
    %789 = vxpose.xlu0.b32.cont [2/16] 0.0, 128
    %790 = vxpose.xlu0.b32.cont [3/16] 0.0, 128
    %791 = vxpose.xlu0.b32.cont [4/16] 0.0, 128
    %792 = vxpose.xlu0.b32.cont [5/16] 0.0, 128
    %793 = vxpose.xlu0.b32.cont [6/16] 0.0, 128
    %794 = vxpose.xlu0.b32.cont [7/16] 0.0, 128
    %795 = vxpose.xlu0.b32.cont [8/16] 0.0, 128
    %796 = vxpose.xlu0.b32.cont [9/16] 0.0, 128
    %797 = vxpose.xlu0.b32.cont [10/16] 0.0, 128
    %798 = vxpose.xlu0.b32.cont [11/16] 0.0, 128
    %799 = vxpose.xlu0.b32.cont [12/16] 0.0, 128
    %800 = vxpose.xlu0.b32.cont [13/16] 0.0, 128
    %801 = vxpose.xlu0.b32.cont [14/16] 0.0, 128
    %802 = vxpose.xlu0.b32.cont [15/16] 0.0, 128
    %803 = vxpose.xlu0.b32.end [16/16] 0.0, 128
    %v804 = vpop.trf.xlu0
    %v805 = vpop.trf.xlu0
    %v806 = vpop.trf.xlu0
    %v807 = vpop.trf.xlu0
    %v808 = vpop.trf.xlu0
    %v809 = vpop.trf.xlu0
    %v810 = vpop.trf.xlu0
    %v811 = vpop.trf.xlu0
    %v812 = vpop.trf.xlu0
    %v813 = vpop.trf.xlu0
    %v814 = vpop.trf.xlu0
    %v815 = vpop.trf.xlu0
    %v816 = vpop.trf.xlu0
    %v817 = vpop.trf.xlu0
    %v818 = vpop.trf.xlu0
    %v819 = vpop.trf.xlu0
    %821 = vrot.lane.b32.xlu0 %v555, 123
    %v822 = vpop.permute.xlu0 %821
    %vm823 = vcmask 7168
    %v825 = vsel %vm823, %v804, 0
    %v828 = vsel %vm823, %v805, 0
    %v831 = vsel %vm823, %v806, 0
    %vm833 = vcmask 1040384
    %v834 = vsel %vm833, %v822, 0
    %836 = vmatprep.subr.mxu0 0.0
    %837 = vmatpush1.msra.mxu0 0.0
    %838 = vmatprep.subr.mxu0 0.0
    %839 = vmatpush1.msra.mxu0 0.0
    %840 = vmatprep.subr.mxu0 0.0
    %841 = vmatpush1.msra.mxu0 0.0
    %842 = vmatprep.subr.mxu0 0.0
    %843 = vmatpush1.msra.mxu0 0.0
    %844 = vmatprep.subr.mxu0 0.0
    %845 = vmatpush1.msra.mxu0 0.0
    %846 = vmatprep.subr.mxu0 0.0
    %847 = vmatpush1.msra.mxu0 0.0
    %848 = vmatprep.subr.mxu0 0.0
    %849 = vmatpush1.msra.mxu0 0.0
    %850 = vmatprep.subr.mxu0 0.0
    %851 = vmatpush1.msra.mxu0 0.0
    %852 = vmatprep.subr.mxu0 0.0
    %853 = vmatpush1.msra.mxu0 0.0
    %854 = vmatprep.subr.mxu0 0.0
    %855 = vmatpush1.msra.mxu0 0.0
    %856 = vmatprep.subr.mxu0 0.0
    %857 = vmatpush1.msra.mxu0 0.0
    %858 = vmatprep.subr.mxu0 0.0
    %859 = vmatpush1.msra.mxu0 0.0
    %860 = vmatprep.subr.mxu0 0.0
    %861 = vmatpush1.msra.mxu0 0.0
    %862 = vmatprep.subr.mxu0 0.0
    %863 = vmatpush1.msra.mxu0 0.0
    %864 = vmatprep.subr.mxu0 0.0
    %865 = vmatpush1.msra.mxu0 0.0
    %866 = vmatprep.subr.mxu0 0.0
    %867 = vmatpush1.msra.mxu0 %v834
    %868 = vmatprep.subr.mxu0 0.0
    %869 = vmatpush2.msra.mxu0 0.0
    %870 = vmatprep.subr.mxu0 0.0
    %871 = vmatpush2.msra.mxu0 0.0
    %872 = vmatprep.subr.mxu0 0.0
    %873 = vmatpush2.msra.mxu0 0.0
    %874 = vmatprep.subr.mxu0 0.0
    %875 = vmatpush2.msra.mxu0 0.0
    %876 = vmatprep.subr.mxu0 0.0
    %877 = vmatpush2.msra.mxu0 0.0
    %878 = vmatprep.subr.mxu0 0.0
    %879 = vmatpush2.msra.mxu0 0.0
    %880 = vmatprep.subr.mxu0 0.0
    %881 = vmatpush2.msra.mxu0 0.0
    %882 = vmatprep.subr.mxu0 0.0
    %883 = vmatpush2.msra.mxu0 0.0
    %884 = vmatprep.subr.mxu0 0.0
    %885 = vmatpush2.msra.mxu0 0.0
    %886 = vmatprep.subr.mxu0 0.0
    %887 = vmatpush2.msra.mxu0 0.0
    %888 = vmatprep.subr.mxu0 0.0
    %889 = vmatpush2.msra.mxu0 0.0
    %890 = vmatprep.subr.mxu0 0.0
    %891 = vmatpush2.msra.mxu0 0.0
    %892 = vmatprep.subr.mxu0 0.0
    %893 = vmatpush2.msra.mxu0 0.0
    %894 = vmatprep.subr.mxu0 0.0
    %895 = vmatpush2.msra.mxu0 0.0
    %896 = vmatprep.subr.mxu0 0.0
    %897 = vmatpush2.msra.mxu0 0.0
    %898 = vmatprep.subr.mxu0 0.0
    %899 = vmatpush2.msra.mxu0 0.0
    %900 = vmatprep.mubr.f32.mxu0 0.0
    %901 = vmatmul.mubr.f32.gmra.mxu0 %v825
    %v902 = vpop.f32.mrf.mxu0
    %v903 = vadd.f32 0.0, %v902
    %v904 = vpop.f32.mrf.mxu0
    %905 = vmatprep.mubr.f32.mxu0 0.0
    %906 = vmatmul.mubr.f32.gmra.mxu0 %v828
    %v907 = vpop.f32.mrf.mxu0
    %v908 = vadd.f32 0.0, %v907
    %v909 = vpop.f32.mrf.mxu0
    %910 = vmatprep.mubr.f32.mxu0 0.0
    %911 = vmatmul.mubr.f32.gmra.mxu0 %v831
    %v912 = vpop.f32.mrf.mxu0
    %v913 = vadd.f32 0.0, %v912
    %v914 = vpop.f32.mrf.mxu0
    %915 = vdwg.mxu0
    %v916 = vmax.f32 %v903, 0.0
    %v917 = vmax.f32 %v908, 0.0
    %v918 = vmax.f32 %v913, 0.0
    %vm919 = vcmask 195584
    %920 = vst.msk [vmem:[%s3] sm:$0xff] %vm919, %v916
    %921 = vst.msk [vmem:[%s3 + $0x8] sm:$0xff] %vm919, %v917
    %922 = vst.msk [vmem:[%s3 + $0x10] sm:$0xff] %vm919, %v918
    %924 = vrot.lane.b32.xlu0 %v669, 123
    %v925 = vpop.permute.xlu0 %924
    %927 = vxpose.xlu0.b32.start [1/16] %v925, 128
    %928 = vxpose.xlu0.b32.cont [2/16] 0.0, 128
    %929 = vxpose.xlu0.b32.cont [3/16] 0.0, 128
    %930 = vxpose.xlu0.b32.cont [4/16] 0.0, 128
    %931 = vxpose.xlu0.b32.cont [5/16] 0.0, 128
    %932 = vxpose.xlu0.b32.cont [6/16] 0.0, 128
    %933 = vxpose.xlu0.b32.cont [7/16] 0.0, 128
    %934 = vxpose.xlu0.b32.cont [8/16] 0.0, 128
    %935 = vxpose.xlu0.b32.cont [9/16] 0.0, 128
    %936 = vxpose.xlu0.b32.cont [10/16] 0.0, 128
    %937 = vxpose.xlu0.b32.cont [11/16] 0.0, 128
    %938 = vxpose.xlu0.b32.cont [12/16] 0.0, 128
    %939 = vxpose.xlu0.b32.cont [13/16] 0.0, 128
    %940 = vxpose.xlu0.b32.cont [14/16] 0.0, 128
    %941 = vxpose.xlu0.b32.cont [15/16] 0.0, 128
    %942 = vxpose.xlu0.b32.end [16/16] 0.0, 128
    %v943 = vpop.trf.xlu0
    %v944 = vpop.trf.xlu0
    %v945 = vpop.trf.xlu0
    %v946 = vpop.trf.xlu0
    %v947 = vpop.trf.xlu0
    %v948 = vpop.trf.xlu0
    %v949 = vpop.trf.xlu0
    %v950 = vpop.trf.xlu0
    %v951 = vpop.trf.xlu0
    %v952 = vpop.trf.xlu0
    %v953 = vpop.trf.xlu0
    %v954 = vpop.trf.xlu0
    %v955 = vpop.trf.xlu0
    %v956 = vpop.trf.xlu0
    %v957 = vpop.trf.xlu0
    %v958 = vpop.trf.xlu0
    %960 = vrot.lane.b32.xlu0 %v726, 123
    %v961 = vpop.permute.xlu0 %960
    %v963 = vsel %vm823, %v943, 0
    %v966 = vsel %vm823, %v944, 0
    %v969 = vsel %vm823, %v945, 0
    %v971 = vsel %vm833, %v961, 0
    %973 = vmatprep.subr.mxu0 0.0
    %974 = vmatpush1.msra.mxu0 0.0
    %975 = vmatprep.subr.mxu0 0.0
    %976 = vmatpush1.msra.mxu0 0.0
    %977 = vmatprep.subr.mxu0 0.0
    %978 = vmatpush1.msra.mxu0 0.0
    %979 = vmatprep.subr.mxu0 0.0
    %980 = vmatpush1.msra.mxu0 0.0
    %981 = vmatprep.subr.mxu0 0.0
    %982 = vmatpush1.msra.mxu0 0.0
    %983 = vmatprep.subr.mxu0 0.0
    %984 = vmatpush1.msra.mxu0 0.0
    %985 = vmatprep.subr.mxu0 0.0
    %986 = vmatpush1.msra.mxu0 0.0
    %987 = vmatprep.subr.mxu0 0.0
    %988 = vmatpush1.msra.mxu0 0.0
    %989 = vmatprep.subr.mxu0 0.0
    %990 = vmatpush1.msra.mxu0 0.0
    %991 = vmatprep.subr.mxu0 0.0
    %992 = vmatpush1.msra.mxu0 0.0
    %993 = vmatprep.subr.mxu0 0.0
    %994 = vmatpush1.msra.mxu0 0.0
    %995 = vmatprep.subr.mxu0 0.0
    %996 = vmatpush1.msra.mxu0 0.0
    %997 = vmatprep.subr.mxu0 0.0
    %998 = vmatpush1.msra.mxu0 0.0
    %999 = vmatprep.subr.mxu0 0.0
    %1000 = vmatpush1.msra.mxu0 0.0
    %1001 = vmatprep.subr.mxu0 0.0
    %1002 = vmatpush1.msra.mxu0 0.0
    %1003 = vmatprep.subr.mxu0 0.0
    %1004 = vmatpush1.msra.mxu0 %v971
    %1005 = vmatprep.subr.mxu0 0.0
    %1006 = vmatpush2.msra.mxu0 0.0
    %1007 = vmatprep.subr.mxu0 0.0
    %1008 = vmatpush2.msra.mxu0 0.0
    %1009 = vmatprep.subr.mxu0 0.0
    %1010 = vmatpush2.msra.mxu0 0.0
    %1011 = vmatprep.subr.mxu0 0.0
    %1012 = vmatpush2.msra.mxu0 0.0
    %1013 = vmatprep.subr.mxu0 0.0
    %1014 = vmatpush2.msra.mxu0 0.0
    %1015 = vmatprep.subr.mxu0 0.0
    %1016 = vmatpush2.msra.mxu0 0.0
    %1017 = vmatprep.subr.mxu0 0.0
    %1018 = vmatpush2.msra.mxu0 0.0
    %1019 = vmatprep.subr.mxu0 0.0
    %1020 = vmatpush2.msra.mxu0 0.0
    %1021 = vmatprep.subr.mxu0 0.0
    %1022 = vmatpush2.msra.mxu0 0.0
    %1023 = vmatprep.subr.mxu0 0.0
    %1024 = vmatpush2.msra.mxu0 0.0
    %1025 = vmatprep.subr.mxu0 0.0
    %1026 = vmatpush2.msra.mxu0 0.0
    %1027 = vmatprep.subr.mxu0 0.0
    %1028 = vmatpush2.msra.mxu0 0.0
    %1029 = vmatprep.subr.mxu0 0.0
    %1030 = vmatpush2.msra.mxu0 0.0
    %1031 = vmatprep.subr.mxu0 0.0
    %1032 = vmatpush2.msra.mxu0 0.0
    %1033 = vmatprep.subr.mxu0 0.0
    %1034 = vmatpush2.msra.mxu0 0.0
    %1035 = vmatprep.subr.mxu0 0.0
    %1036 = vmatpush2.msra.mxu0 0.0
    %1037 = vmatprep.mubr.f32.mxu0 0.0
    %1038 = vmatmul.mubr.f32.gmra.mxu0 %v963
    %v1039 = vpop.f32.mrf.mxu0
    %v1040 = vadd.f32 0.0, %v1039
    %v1041 = vpop.f32.mrf.mxu0
    %1042 = vmatprep.mubr.f32.mxu0 0.0
    %1043 = vmatmul.mubr.f32.gmra.mxu0 %v966
    %v1044 = vpop.f32.mrf.mxu0
    %v1045 = vadd.f32 0.0, %v1044
    %v1046 = vpop.f32.mrf.mxu0
    %1047 = vmatprep.mubr.f32.mxu0 0.0
    %1048 = vmatmul.mubr.f32.gmra.mxu0 %v969
    %v1049 = vpop.f32.mrf.mxu0
    %v1050 = vadd.f32 0.0, %v1049
    %v1051 = vpop.f32.mrf.mxu0
    %1052 = vdwg.mxu0
    %v1053 = vmax.f32 %v1040, 0.0
    %v1054 = vmax.f32 %v1045, 0.0
    %v1055 = vmax.f32 %v1050, 0.0
    %s1056 = scalar_lea.vmem %s3, 24
    %1057 = vst.msk [vmem:[%s1056] sm:$0xff] %vm919, %v1053
    %1058 = vst.msk [vmem:[%s1056 + $0x8] sm:$0xff] %vm919, %v1054
    %1059 = vst.msk [vmem:[%s1056 + $0x10] sm:$0xff] %vm919, %v1055
    %v1060 = vmax.f32 %v612, 0.0
    %1062 = vrot.lane.b32.xlu0 %v1060, 123
    %v1063 = vpop.permute.xlu0 %1062
    %vm1065 = vcmask 57344
    %1066 = vst.msk [vmem:[%s4] sm:$0x1] %vm1065, %v1063
    %v1067 = vmax.f32 %v783, 0.0
    %1069 = vrot.lane.b32.xlu0 %v1067, 123
    %v1070 = vpop.permute.xlu0 %1069
    %s1072 = scalar_lea.vmem %s4, 1
    %1073 = vst.msk [vmem:[%s1072] sm:$0x1] %vm1065, %v1070
    // Predicated region
    $region22: #{_lambda_.1} parent=1 // pred_check
      _
    $region23: #{_lambda_.1} parent=1 // pred_check_branch
      %1075 = sbr.rel (0) target = $region25
    $region24: #{_lambda_.1} parent=1 // pred_region
      _
    $region25: #{_lambda_.1} parent=1 // pred_fallthru
      _
    // Predicated region
    $region26: #{_lambda_.1} parent=1 // pred_check
      _
    $region27: #{_lambda_.1} parent=1 // pred_check_branch
      %1077 = sbr.rel (0) target = $region29
    $region28: #{_lambda_.1} parent=1 // pred_region
      _
    $region29: #{_lambda_.1} parent=1 // pred_fallthru
      _
    // Predicated region
    $region30: #{_lambda_.1} parent=1 // pred_check
      _
    $region31: #{_lambda_.1} parent=1 // pred_check_branch
      %1079 = sbr.rel (0) target = $region33
    $region32: #{_lambda_.1} parent=1 // pred_region
      _
    $region33: #{_lambda_.1} parent=1 // pred_fallthru
      _
    // Predicated region
    $region34: #{_lambda_.1} parent=1 // pred_check
      _
    $region35: #{_lambda_.1} parent=1 // pred_check_branch
      %1081 = sbr.rel (0) target = $region37
    $region36: #{_lambda_.1} parent=1 // pred_region
      _
    $region37: #{_lambda_.1} parent=1 // pred_fallthru
      _
    %1082 = vsyncpa [#allocation3], 1
    %1083 = vsyncpa [#allocation5], 1

</llo_original>
